<compile_context>
chip_gen: v6e
topology: v6e:2x2x1
jax: 0.10.0
libtpu: 0.0.40
codegen_flags: <defaults>
</compile_context>

<pallas_src>
import jax
import jax.numpy as jnp
from jax.experimental import pallas as pl
from jax.experimental.pallas import tpu as pltpu

LN_EPS = 1e-5
_GELU_C = 0.7978845608028654   # sqrt(2/pi)


def _round_up(x, m):
    return ((x + m - 1) // m) * m


# ----------------------------- in-kernel helpers -----------------------------
def _gelu(x):
    # tanh-approximate GELU: the tanh lowers to the EUP (free slot), dropping the
    # ~12 VALU ops of the erf polynomial.  |err| vs exact GELU < ~3e-4.
    return 0.5 * x * (1.0 + jnp.tanh(_GELU_C * (x + 0.044715 * x * x * x)))


def _layer_norm(x, g, b):
    mu = jnp.mean(x, axis=-1, keepdims=True)
    var = jnp.mean(jnp.square(x - mu), axis=-1, keepdims=True)
    return (x - mu) * jax.lax.rsqrt(var + LN_EPS) * g + b


def _linear(x, w_t, b):
    return jnp.dot(x, w_t, preferred_element_type=jnp.float32) + b


# --------------------------------- the kernel --------------------------------
def generator_kernel(
    noise_ref, cond_ref,
    ne_wt, ne_b,                       # noise_embedding
    cp_wt, cp_b, cp_g, cp_beta,        # cond_proj: Linear + LayerNorm (+GELU)
    ca_w, ca_b,                        # cross_attn, folded out_proj(v_proj(.))
    fi_wa, fi_wn, fi_b,                # feature_interaction, folded halves
    sa_w, sa_b,                        # encoder self-attn, folded out_proj(v_proj(.))
    ln1_g, ln1_b, ln2_g, ln2_b,        # encoder norm1 / norm2
    ff1_wt, ff1_b, ff2_wt, ff2_b,      # encoder feed-forward
    fc0_wt, fc0_b, fc1_wt, fc1_b,      # fc_layers (Linear+ReLU) x 2
    fo_wt, fo_b,                       # fc_out, columns zero-padded to 128-lane multiple
    out_ref,
):
    noise = noise_ref[...]
    cond = cond_ref[...]

    # noise_proj = noise_embedding(noise)
    noise_proj = _linear(noise, ne_wt[...], ne_b[...])

    # cond_proj = GELU(LayerNorm(Linear(cond)))
    cond_p = _gelu(_layer_norm(_linear(cond, cp_wt[...], cp_b[...]),
                               cp_g[...], cp_beta[...]))

    # cross_attn(query=noise_proj[:,None], key=value=cond_proj[:,None]):
    # key/value sequence length is 1, so softmax over a single key is identically 1
    # for every head and the attention output reduces exactly to
    # out_proj(v_proj(value)); q/k projections cancel.  Folded offline into ca_w/ca_b.
    attn = _linear(cond_p, ca_w[...], ca_b[...])

    # residual add, then cat([attn, noise_proj], feature dim) -> Linear(2H->H) -> GELU,
    # folded as:  cat(attn+n, n) @ [Wa; Wb]  ==  attn @ Wa + n @ (Wa + Wb)
    x = _gelu(jnp.dot(attn, fi_wa[...], preferred_element_type=jnp.float32)
              + jnp.dot(noise_proj, fi_wn[...], preferred_element_type=jnp.float32)
              + fi_b[...])

    # TransformerEncoder (num_layers=1), norm_first=True, batch_first=True,
    # seq length 1, activation=ReLU, dim_feedforward=hidden_dim, eval-mode dropout.
    # Single-token self-attention again collapses to out_proj(v_proj(.)) (folded).
    h = _layer_norm(x, ln1_g[...], ln1_b[...])
    x = x + _linear(h, sa_w[...], sa_b[...])
    h = _layer_norm(x, ln2_g[...], ln2_b[...])
    x = x + _linear(jnp.maximum(_linear(h, ff1_wt[...], ff1_b[...]), 0.0),
                    ff2_wt[...], ff2_b[...])

    # fc_layers: (Linear -> ReLU) x 2, then fc_out (lane-padded, unmasked store).
    x = jnp.maximum(_linear(x, fc0_wt[...], fc0_b[...]), 0.0)
    x = jnp.maximum(_linear(x, fc1_wt[...], fc1_b[...]), 0.0)
    out_ref[...] = _linear(x, fo_wt[...], fo_b[...]).astype(out_ref.dtype)


# ----------------------------- parameter creation ----------------------------
def init_params(key, *, noise_dim, cond_dim, hidden_dim, fc_dim, data_dim):
    H, F = hidden_dim, fc_dim
    ff_dim = hidden_dim                      # parent: dim_feedforward = hidden_dim

    def torch_linear(k, fan_in, fan_out):    # torch layout: (out, in), (out,)
        kw, kb = jax.random.split(k)
        bound = 1.0 / float(fan_in) ** 0.5
        w = jax.random.uniform(kw, (fan_out, fan_in), jnp.float32, -bound, bound)
        b = jax.random.uniform(kb, (fan_out,), jnp.float32, -bound, bound)
        return w, b

    ks = iter(jax.random.split(key, 16))
    p = {}
    # noise_embedding: Linear(noise_dim -> H)
    w, b = torch_linear(next(ks), noise_dim, H)
    p["ne"] = (w.T, b[None])
    # cond_proj: Linear(cond_dim -> H) + LayerNorm(H) (gamma=1, beta=0)
    w, b = torch_linear(next(ks), cond_dim, H)
    p["cp"] = (w.T, b[None],
               jnp.ones((1, H), jnp.float32), jnp.zeros((1, H), jnp.float32))
    # cross attention: in_proj (3H, H) + out_proj (H, H); only the V slice matters.
    w_in, b_in = torch_linear(next(ks), H, 3 * H)
    w_out, b_out = torch_linear(next(ks), H, H)
    p["ca"] = (w_in[2 * H:].T, b_in[2 * H:][None], w_out.T, b_out[None])
    # feature_interaction: Linear(2H -> H), stored as two (H, H) halves.
    w, b = torch_linear(next(ks), 2 * H, H)
    wt = w.T                                  # (2H, H)
    p["fi"] = (wt[:H], wt[H:], b[None])
    # encoder self-attention
    w_in, b_in = torch_linear(next(ks), H, 3 * H)
    w_out, b_out = torch_linear(next(ks), H, H)
    p["sa"] = (w_in[2 * H:].T, b_in[2 * H:][None], w_out.T, b_out[None])
    # encoder norm1 / norm2
    p["ln"] = (jnp.ones((1, H), jnp.float32), jnp.zeros((1, H), jnp.float32),
               jnp.ones((1, H), jnp.float32), jnp.zeros((1, H), jnp.float32))
    # encoder feed-forward
    w1, b1 = torch_linear(next(ks), H, ff_dim)
    w2, b2 = torch_linear(next(ks), ff_dim, H)
    p["ff"] = (w1.T, b1[None], w2.T, b2[None])
    # fc_layers
    w0, b0 = torch_linear(next(ks), H, F)
    w1, b1 = torch_linear(next(ks), F, F)
    p["fc"] = (w0.T, b0[None], w1.T, b1[None])
    # fc_out
    w, b = torch_linear(next(ks), F, data_dim)
    p["fo"] = (w.T, b[None])
    return p


def fold_params(p, *, data_dim):
    """Offline linear folding + lane-padding of fc_out. Exact (pure linear algebra)."""
    ne_wt, ne_b = p["ne"]
    cp_wt, cp_b, cp_g, cp_beta = p["cp"]

    # cross-attn: out_proj(v_proj(x)) = x @ (Wv_t @ Wo_t) + (bv @ Wo_t + bo)
    ca_wv, ca_bv, ca_wo, ca_bo = p["ca"]
    ca_w = ca_wv @ ca_wo
    ca_b = ca_bv @ ca_wo + ca_bo

    # feature_interaction: cat(attn+n, n) @ [Wa;Wb] = attn@Wa + n@(Wa+Wb)
    fi_wa, fi_wb, fi_b = p["fi"]
    fi_wn = fi_wa + fi_wb

    # encoder self-attn (seq len 1): same fold as cross-attn.
    sa_wv, sa_bv, sa_wo, sa_bo = p["sa"]
    sa_w = sa_wv @ sa_wo
    sa_b = sa_bv @ sa_wo + sa_bo

    # fc_out: zero-pad output columns to a 128-lane multiple for unmasked stores.
    fo_wt, fo_b = p["fo"]
    F = fo_wt.shape[0]
    out_lanes = _round_up(max(data_dim, 128), 128)
    fo_wt_p = jnp.zeros((F, out_lanes), jnp.float32).at[:, :data_dim].set(fo_wt)
    fo_b_p = jnp.zeros((1, out_lanes), jnp.float32).at[:, :data_dim].set(fo_b)

    return (ne_wt, ne_b, cp_wt, cp_b, cp_g, cp_beta,
            ca_w, ca_b, fi_wa, fi_wn, fi_b, sa_w, sa_b,
            *p["ln"], *p["ff"], *p["fc"], fo_wt_p, fo_b_p)


# --------------------------------- wrapper ------------------------------------
def enhanced_transformer_generator(z, params, *, noise_dim, data_dim, tile_b=None):
    B, zdim = z.shape
    cond_dim = zdim - noise_dim

    if tile_b is None:
        # Single grid step for small batches; 512-row tiles for large B.
        # 512 rows x <=128 f32 lanes per live activation stays comfortably inside
        # the 32 MiB scoped-VMEM default on every generation (incl. v7x's 64 MiB);
        # on v7x multi-step grids shard across both TensorCores via "parallel".
        tile_b = min(512, _round_up(B, 8))
    Bp = _round_up(B, tile_b)

    z32 = z.astype(jnp.float32)
    noise = jnp.zeros((Bp, noise_dim), jnp.float32).at[:B].set(z32[:, :noise_dim])
    cond = jnp.zeros((Bp, cond_dim), jnp.float32).at[:B].set(z32[:, noise_dim:])

    weights = fold_params(params, data_dim=data_dim)
    out_lanes = weights[-1].shape[-1]

    in_specs = [pl.BlockSpec((tile_b, noise_dim), lambda i: (i, 0)),
                pl.BlockSpec((tile_b, cond_dim), lambda i: (i, 0))]
    in_specs += [pl.BlockSpec(w.shape, lambda i: (0, 0)) for w in weights]
    out_specs = pl.BlockSpec((tile_b, out_lanes), lambda i: (i, 0))

    out = pl.pallas_call(
        generator_kernel,
        out_shape=jax.ShapeDtypeStruct((Bp, out_lanes), jnp.float32),
        grid=(Bp // tile_b,),
        in_specs=in_specs,
        out_specs=out_specs,
        compiler_params=pltpu.CompilerParams(dimension_semantics=("parallel",)),
    )(noise, cond, *weights)

    # restore the length-1 sequence axis produced by the PyTorch forward.
    return out[:B, :data_dim].reshape(B, 1, data_dim)


# ----------------------------- plain-JAX reference ----------------------------
def reference_forward(z, p, *, noise_dim):
    def lin(x, wt, b):
        return jnp.dot(x, wt) + b

    def ln(x, g, b):
        mu = x.mean(-1, keepdims=True)
        var = ((x - mu) ** 2).mean(-1, keepdims=True)
        return (x - mu) / jnp.sqrt(var + LN_EPS) * g + b

    gelu = lambda x: jax.nn.gelu(x, approximate=False)   # torch exact-erf GELU
    noise, cond = z[:, :noise_dim], z[:, noise_dim:]
    noise_proj = lin(noise, *p["ne"])
    cp_wt, cp_b, cp_g, cp_beta = p["cp"]
    cond_p = gelu(ln(lin(cond, cp_wt, cp_b), cp_g, cp_beta))
    ca_wv, ca_bv, ca_wo, ca_bo = p["ca"]
    attn = lin(lin(cond_p, ca_wv, ca_bv), ca_wo, ca_bo) + noise_proj
    fi_wa, fi_wb, fi_b = p["fi"]
    x = gelu(lin(jnp.concatenate([attn, noise_proj], -1),
                 jnp.concatenate([fi_wa, fi_wb], 0), fi_b))
    sa_wv, sa_bv, sa_wo, sa_bo = p["sa"]
    ln1_g, ln1_b, ln2_g, ln2_b = p["ln"]
    ff1_wt, ff1_b, ff2_wt, ff2_b = p["ff"]
    h = ln(x, ln1_g, ln1_b)
    x = x + lin(lin(h, sa_wv, sa_bv), sa_wo, sa_bo)
    h = ln(x, ln2_g, ln2_b)
    x = x + lin(jnp.maximum(lin(h, ff1_wt, ff1_b), 0.0), ff2_wt, ff2_b)
    fc0_wt, fc0_b, fc1_wt, fc1_b = p["fc"]
    x = jnp.maximum(lin(x, fc0_wt, fc0_b), 0.0)
    x = jnp.maximum(lin(x, fc1_wt, fc1_b), 0.0)
    return lin(x, *p["fo"])[:, None, :]


# ------------------------------------ main -------------------------------------
if __name__ == "__main__":
    NOISE_DIM, COND_DIM = 16, 8
    HIDDEN_DIM, FC_DIM, DATA_DIM = 32, 32, 12
    B = 4

    key = jax.random.PRNGKey(0)
    k_p, k_z = jax.random.split(key)
    params = init_params(k_p, noise_dim=NOISE_DIM, cond_dim=COND_DIM,
                         hidden_dim=HIDDEN_DIM, fc_dim=FC_DIM, data_dim=DATA_DIM)
    z = jax.random.normal(k_z, (B, NOISE_DIM + COND_DIM), jnp.float32)

    out = enhanced_transformer_generator(z, params,
                                         noise_dim=NOISE_DIM, data_dim=DATA_DIM)
    out = jax.block_until_ready(out)

    ref = reference_forward(z, params, noise_dim=NOISE_DIM)
    assert out.shape == (B, 1, DATA_DIM), out.shape
    max_err = float(jnp.max(jnp.abs(out - ref)))
    assert max_err < 5e-2, f"mismatch vs plain-JAX reference: {max_err}"
    print("KERNEL_OK")
</pallas_src>

<mosaic_0001>
module attributes {stable_mosaic.version = 11 : i64} {
  func.func @generator_kernel(%arg0: i32, %arg1: memref<8x16xf32, #tpu.memory_space<vmem>>, %arg2: memref<8x8xf32, #tpu.memory_space<vmem>>, %arg3: memref<16x32xf32, #tpu.memory_space<vmem>>, %arg4: memref<1x32xf32, #tpu.memory_space<vmem>>, %arg5: memref<8x32xf32, #tpu.memory_space<vmem>>, %arg6: memref<1x32xf32, #tpu.memory_space<vmem>>, %arg7: memref<1x32xf32, #tpu.memory_space<vmem>>, %arg8: memref<1x32xf32, #tpu.memory_space<vmem>>, %arg9: memref<32x32xf32, #tpu.memory_space<vmem>>, %arg10: memref<1x32xf32, #tpu.memory_space<vmem>>, %arg11: memref<32x32xf32, #tpu.memory_space<vmem>>, %arg12: memref<32x32xf32, #tpu.memory_space<vmem>>, %arg13: memref<1x32xf32, #tpu.memory_space<vmem>>, %arg14: memref<32x32xf32, #tpu.memory_space<vmem>>, %arg15: memref<1x32xf32, #tpu.memory_space<vmem>>, %arg16: memref<1x32xf32, #tpu.memory_space<vmem>>, %arg17: memref<1x32xf32, #tpu.memory_space<vmem>>, %arg18: memref<1x32xf32, #tpu.memory_space<vmem>>, %arg19: memref<1x32xf32, #tpu.memory_space<vmem>>, %arg20: memref<32x32xf32, #tpu.memory_space<vmem>>, %arg21: memref<1x32xf32, #tpu.memory_space<vmem>>, %arg22: memref<32x32xf32, #tpu.memory_space<vmem>>, %arg23: memref<1x32xf32, #tpu.memory_space<vmem>>, %arg24: memref<32x32xf32, #tpu.memory_space<vmem>>, %arg25: memref<1x32xf32, #tpu.memory_space<vmem>>, %arg26: memref<32x32xf32, #tpu.memory_space<vmem>>, %arg27: memref<1x32xf32, #tpu.memory_space<vmem>>, %arg28: memref<32x128xf32, #tpu.memory_space<vmem>>, %arg29: memref<1x128xf32, #tpu.memory_space<vmem>>, %arg30: memref<8x128xf32, #tpu.memory_space<vmem>>) attributes {dimension_semantics = [#tpu.dimension_semantics<parallel>], iteration_bounds = array<i64: 1>, scalar_prefetch = 0 : i64, scratch_operands = 0 : i64, tpu.core_type = #tpu.core_type<tc>, window_params = [{transform_indices = @transform_0, window_bounds = array<i64: 8, 16>}, {transform_indices = @transform_1, window_bounds = array<i64: 8, 8>}, {pipeline_mode = #tpu.pipeline_mode<synchronous>, transform_indices = @transform_2, window_bounds = array<i64: 16, 32>}, {pipeline_mode = #tpu.pipeline_mode<synchronous>, transform_indices = @transform_3, window_bounds = array<i64: 1, 32>}, {pipeline_mode = #tpu.pipeline_mode<synchronous>, transform_indices = @transform_4, window_bounds = array<i64: 8, 32>}, {pipeline_mode = #tpu.pipeline_mode<synchronous>, transform_indices = @transform_5, window_bounds = array<i64: 1, 32>}, {pipeline_mode = #tpu.pipeline_mode<synchronous>, transform_indices = @transform_6, window_bounds = array<i64: 1, 32>}, {pipeline_mode = #tpu.pipeline_mode<synchronous>, transform_indices = @transform_7, window_bounds = array<i64: 1, 32>}, {pipeline_mode = #tpu.pipeline_mode<synchronous>, transform_indices = @transform_8, window_bounds = array<i64: 32, 32>}, {pipeline_mode = #tpu.pipeline_mode<synchronous>, transform_indices = @transform_9, window_bounds = array<i64: 1, 32>}, {pipeline_mode = #tpu.pipeline_mode<synchronous>, transform_indices = @transform_10, window_bounds = array<i64: 32, 32>}, {pipeline_mode = #tpu.pipeline_mode<synchronous>, transform_indices = @transform_11, window_bounds = array<i64: 32, 32>}, {pipeline_mode = #tpu.pipeline_mode<synchronous>, transform_indices = @transform_12, window_bounds = array<i64: 1, 32>}, {pipeline_mode = #tpu.pipeline_mode<synchronous>, transform_indices = @transform_13, window_bounds = array<i64: 32, 32>}, {pipeline_mode = #tpu.pipeline_mode<synchronous>, transform_indices = @transform_14, window_bounds = array<i64: 1, 32>}, {pipeline_mode = #tpu.pipeline_mode<synchronous>, transform_indices = @transform_15, window_bounds = array<i64: 1, 32>}, {pipeline_mode = #tpu.pipeline_mode<synchronous>, transform_indices = @transform_16, window_bounds = array<i64: 1, 32>}, {pipeline_mode = #tpu.pipeline_mode<synchronous>, transform_indices = @transform_17, window_bounds = array<i64: 1, 32>}, {pipeline_mode = #tpu.pipeline_mode<synchronous>, transform_indices = @transform_18, window_bounds = array<i64: 1, 32>}, {pipeline_mode = #tpu.pipeline_mode<synchronous>, transform_indices = @transform_19, window_bounds = array<i64: 32, 32>}, {pipeline_mode = #tpu.pipeline_mode<synchronous>, transform_indices = @transform_20, window_bounds = array<i64: 1, 32>}, {pipeline_mode = #tpu.pipeline_mode<synchronous>, transform_indices = @transform_21, window_bounds = array<i64: 32, 32>}, {pipeline_mode = #tpu.pipeline_mode<synchronous>, transform_indices = @transform_22, window_bounds = array<i64: 1, 32>}, {pipeline_mode = #tpu.pipeline_mode<synchronous>, transform_indices = @transform_23, window_bounds = array<i64: 32, 32>}, {pipeline_mode = #tpu.pipeline_mode<synchronous>, transform_indices = @transform_24, window_bounds = array<i64: 1, 32>}, {pipeline_mode = #tpu.pipeline_mode<synchronous>, transform_indices = @transform_25, window_bounds = array<i64: 32, 32>}, {pipeline_mode = #tpu.pipeline_mode<synchronous>, transform_indices = @transform_26, window_bounds = array<i64: 1, 32>}, {pipeline_mode = #tpu.pipeline_mode<synchronous>, transform_indices = @transform_27, window_bounds = array<i64: 32, 128>}, {pipeline_mode = #tpu.pipeline_mode<synchronous>, transform_indices = @transform_28, window_bounds = array<i64: 1, 128>}, {transform_indices = @transform_29, window_bounds = array<i64: 8, 128>}]} {
    %c0 = arith.constant 0 : index
    %c0_0 = arith.constant 0 : index
    %0 = vector.load %arg1[%c0, %c0_0] : memref<8x16xf32, #tpu.memory_space<vmem>>, vector<8x16xf32>
    %c0_1 = arith.constant 0 : index
    %c0_2 = arith.constant 0 : index
    %1 = vector.load %arg2[%c0_1, %c0_2] : memref<8x8xf32, #tpu.memory_space<vmem>>, vector<8x8xf32>
    %c0_3 = arith.constant 0 : index
    %c0_4 = arith.constant 0 : index
    %2 = vector.load %arg3[%c0_3, %c0_4] : memref<16x32xf32, #tpu.memory_space<vmem>>, vector<16x32xf32>
    %c0_5 = arith.constant 0 : index
    %c0_6 = arith.constant 0 : index
    %3 = vector.load %arg4[%c0_5, %c0_6] : memref<1x32xf32, #tpu.memory_space<vmem>>, vector<1x32xf32>
    %cst = arith.constant dense<0.000000e+00> : vector<8x32xf32>
    %4 = tpu.matmul %0, %2, %cst {dimension_numbers = #tpu.dot_dimension_numbers<[1], [0], [0], [1], [0, 0, 1, 1], [], []>} : vector<8x16xf32>, vector<16x32xf32>, vector<8x32xf32> -> vector<8x32xf32>
    %5 = vector.broadcast %3 : vector<1x32xf32> to vector<8x32xf32>
    %6 = arith.addf %4, %5 : vector<8x32xf32>
    %c0_7 = arith.constant 0 : index
    %c0_8 = arith.constant 0 : index
    %7 = vector.load %arg5[%c0_7, %c0_8] : memref<8x32xf32, #tpu.memory_space<vmem>>, vector<8x32xf32>
    %c0_9 = arith.constant 0 : index
    %c0_10 = arith.constant 0 : index
    %8 = vector.load %arg6[%c0_9, %c0_10] : memref<1x32xf32, #tpu.memory_space<vmem>>, vector<1x32xf32>
    %cst_11 = arith.constant dense<0.000000e+00> : vector<8x32xf32>
    %9 = tpu.matmul %1, %7, %cst_11 {dimension_numbers = #tpu.dot_dimension_numbers<[1], [0], [0], [1], [0, 0, 1, 1], [], []>} : vector<8x8xf32>, vector<8x32xf32>, vector<8x32xf32> -> vector<8x32xf32>
    %10 = vector.broadcast %8 : vector<1x32xf32> to vector<8x32xf32>
    %11 = arith.addf %9, %10 : vector<8x32xf32>
    %c0_12 = arith.constant 0 : index
    %c0_13 = arith.constant 0 : index
    %12 = vector.load %arg7[%c0_12, %c0_13] : memref<1x32xf32, #tpu.memory_space<vmem>>, vector<1x32xf32>
    %c0_14 = arith.constant 0 : index
    %c0_15 = arith.constant 0 : index
    %13 = vector.load %arg8[%c0_14, %c0_15] : memref<1x32xf32, #tpu.memory_space<vmem>>, vector<1x32xf32>
    %cst_16 = arith.constant dense<0.000000e+00> : vector<8xf32>
    %14 = vector.multi_reduction <add>, %11, %cst_16 [1] : vector<8x32xf32> to vector<8xf32>
    %15 = vector.shape_cast %14 : vector<8xf32> to vector<8x1xf32>
    %cst_17 = arith.constant 3.200000e+01 : f32
    %16 = vector.broadcast %cst_17 : f32 to vector<8x1xf32>
    %17 = arith.divf %15, %16 : vector<8x1xf32>
    %18 = vector.broadcast %17 : vector<8x1xf32> to vector<8x32xf32>
    %19 = arith.subf %11, %18 : vector<8x32xf32>
    %20 = arith.mulf %19, %19 : vector<8x32xf32>
    %cst_18 = arith.constant dense<0.000000e+00> : vector<8xf32>
    %21 = vector.multi_reduction <add>, %20, %cst_18 [1] : vector<8x32xf32> to vector<8xf32>
    %22 = vector.shape_cast %21 : vector<8xf32> to vector<8x1xf32>
    %cst_19 = arith.constant 3.200000e+01 : f32
    %23 = vector.broadcast %cst_19 : f32 to vector<8x1xf32>
    %24 = arith.divf %22, %23 : vector<8x1xf32>
    %25 = vector.broadcast %17 : vector<8x1xf32> to vector<8x32xf32>
    %26 = arith.subf %11, %25 : vector<8x32xf32>
    %cst_20 = arith.constant 9.99999974E-6 : f32
    %27 = vector.broadcast %cst_20 : f32 to vector<8x1xf32>
    %28 = arith.addf %24, %27 : vector<8x1xf32>
    %29 = math.rsqrt %28 : vector<8x1xf32>
    %30 = vector.broadcast %29 : vector<8x1xf32> to vector<8x32xf32>
    %31 = arith.mulf %26, %30 : vector<8x32xf32>
    %32 = vector.broadcast %12 : vector<1x32xf32> to vector<8x32xf32>
    %33 = arith.mulf %31, %32 : vector<8x32xf32>
    %34 = vector.broadcast %13 : vector<1x32xf32> to vector<8x32xf32>
    %35 = arith.addf %33, %34 : vector<8x32xf32>
    %cst_21 = arith.constant 5.000000e-01 : f32
    %36 = vector.broadcast %cst_21 : f32 to vector<8x32xf32>
    %37 = arith.mulf %36, %35 : vector<8x32xf32>
    %cst_22 = arith.constant 4.471500e-02 : f32
    %38 = vector.broadcast %cst_22 : f32 to vector<8x32xf32>
    %39 = arith.mulf %38, %35 : vector<8x32xf32>
    %40 = arith.mulf %39, %35 : vector<8x32xf32>
    %41 = arith.mulf %40, %35 : vector<8x32xf32>
    %42 = arith.addf %35, %41 : vector<8x32xf32>
    %cst_23 = arith.constant 0.797884583 : f32
    %43 = vector.broadcast %cst_23 : f32 to vector<8x32xf32>
    %44 = arith.mulf %43, %42 : vector<8x32xf32>
    %45 = math.tanh %44 : vector<8x32xf32>
    %cst_24 = arith.constant 1.000000e+00 : f32
    %46 = vector.broadcast %cst_24 : f32 to vector<8x32xf32>
    %47 = arith.addf %46, %45 : vector<8x32xf32>
    %48 = arith.mulf %37, %47 : vector<8x32xf32>
    %c0_25 = arith.constant 0 : index
    %c0_26 = arith.constant 0 : index
    %49 = vector.load %arg9[%c0_25, %c0_26] : memref<32x32xf32, #tpu.memory_space<vmem>>, vector<32x32xf32>
    %c0_27 = arith.constant 0 : index
    %c0_28 = arith.constant 0 : index
    %50 = vector.load %arg10[%c0_27, %c0_28] : memref<1x32xf32, #tpu.memory_space<vmem>>, vector<1x32xf32>
    %cst_29 = arith.constant dense<0.000000e+00> : vector<8x32xf32>
    %51 = tpu.matmul %48, %49, %cst_29 {dimension_numbers = #tpu.dot_dimension_numbers<[1], [0], [0], [1], [0, 0, 1, 1], [], []>} : vector<8x32xf32>, vector<32x32xf32>, vector<8x32xf32> -> vector<8x32xf32>
    %52 = vector.broadcast %50 : vector<1x32xf32> to vector<8x32xf32>
    %53 = arith.addf %51, %52 : vector<8x32xf32>
    %c0_30 = arith.constant 0 : index
    %c0_31 = arith.constant 0 : index
    %54 = vector.load %arg11[%c0_30, %c0_31] : memref<32x32xf32, #tpu.memory_space<vmem>>, vector<32x32xf32>
    %cst_32 = arith.constant dense<0.000000e+00> : vector<8x32xf32>
    %55 = tpu.matmul %53, %54, %cst_32 {dimension_numbers = #tpu.dot_dimension_numbers<[1], [0], [0], [1], [0, 0, 1, 1], [], []>} : vector<8x32xf32>, vector<32x32xf32>, vector<8x32xf32> -> vector<8x32xf32>
    %c0_33 = arith.constant 0 : index
    %c0_34 = arith.constant 0 : index
    %56 = vector.load %arg12[%c0_33, %c0_34] : memref<32x32xf32, #tpu.memory_space<vmem>>, vector<32x32xf32>
    %cst_35 = arith.constant dense<0.000000e+00> : vector<8x32xf32>
    %57 = tpu.matmul %6, %56, %cst_35 {dimension_numbers = #tpu.dot_dimension_numbers<[1], [0], [0], [1], [0, 0, 1, 1], [], []>} : vector<8x32xf32>, vector<32x32xf32>, vector<8x32xf32> -> vector<8x32xf32>
    %58 = arith.addf %55, %57 : vector<8x32xf32>
    %c0_36 = arith.constant 0 : index
    %c0_37 = arith.constant 0 : index
    %59 = vector.load %arg13[%c0_36, %c0_37] : memref<1x32xf32, #tpu.memory_space<vmem>>, vector<1x32xf32>
    %60 = vector.broadcast %59 : vector<1x32xf32> to vector<8x32xf32>
    %61 = arith.addf %58, %60 : vector<8x32xf32>
    %cst_38 = arith.constant 5.000000e-01 : f32
    %62 = vector.broadcast %cst_38 : f32 to vector<8x32xf32>
    %63 = arith.mulf %62, %61 : vector<8x32xf32>
    %cst_39 = arith.constant 4.471500e-02 : f32
    %64 = vector.broadcast %cst_39 : f32 to vector<8x32xf32>
    %65 = arith.mulf %64, %61 : vector<8x32xf32>
    %66 = arith.mulf %65, %61 : vector<8x32xf32>
    %67 = arith.mulf %66, %61 : vector<8x32xf32>
    %68 = arith.addf %61, %67 : vector<8x32xf32>
    %cst_40 = arith.constant 0.797884583 : f32
    %69 = vector.broadcast %cst_40 : f32 to vector<8x32xf32>
    %70 = arith.mulf %69, %68 : vector<8x32xf32>
    %71 = math.tanh %70 : vector<8x32xf32>
    %cst_41 = arith.constant 1.000000e+00 : f32
    %72 = vector.broadcast %cst_41 : f32 to vector<8x32xf32>
    %73 = arith.addf %72, %71 : vector<8x32xf32>
    %74 = arith.mulf %63, %73 : vector<8x32xf32>
    %c0_42 = arith.constant 0 : index
    %c0_43 = arith.constant 0 : index
    %75 = vector.load %arg16[%c0_42, %c0_43] : memref<1x32xf32, #tpu.memory_space<vmem>>, vector<1x32xf32>
    %c0_44 = arith.constant 0 : index
    %c0_45 = arith.constant 0 : index
    %76 = vector.load %arg17[%c0_44, %c0_45] : memref<1x32xf32, #tpu.memory_space<vmem>>, vector<1x32xf32>
    %cst_46 = arith.constant dense<0.000000e+00> : vector<8xf32>
    %77 = vector.multi_reduction <add>, %74, %cst_46 [1] : vector<8x32xf32> to vector<8xf32>
    %78 = vector.shape_cast %77 : vector<8xf32> to vector<8x1xf32>
    %cst_47 = arith.constant 3.200000e+01 : f32
    %79 = vector.broadcast %cst_47 : f32 to vector<8x1xf32>
    %80 = arith.divf %78, %79 : vector<8x1xf32>
    %81 = vector.broadcast %80 : vector<8x1xf32> to vector<8x32xf32>
    %82 = arith.subf %74, %81 : vector<8x32xf32>
    %83 = arith.mulf %82, %82 : vector<8x32xf32>
    %cst_48 = arith.constant dense<0.000000e+00> : vector<8xf32>
    %84 = vector.multi_reduction <add>, %83, %cst_48 [1] : vector<8x32xf32> to vector<8xf32>
    %85 = vector.shape_cast %84 : vector<8xf32> to vector<8x1xf32>
    %cst_49 = arith.constant 3.200000e+01 : f32
    %86 = vector.broadcast %cst_49 : f32 to vector<8x1xf32>
    %87 = arith.divf %85, %86 : vector<8x1xf32>
    %88 = vector.broadcast %80 : vector<8x1xf32> to vector<8x32xf32>
    %89 = arith.subf %74, %88 : vector<8x32xf32>
    %cst_50 = arith.constant 9.99999974E-6 : f32
    %90 = vector.broadcast %cst_50 : f32 to vector<8x1xf32>
    %91 = arith.addf %87, %90 : vector<8x1xf32>
    %92 = math.rsqrt %91 : vector<8x1xf32>
    %93 = vector.broadcast %92 : vector<8x1xf32> to vector<8x32xf32>
    %94 = arith.mulf %89, %93 : vector<8x32xf32>
    %95 = vector.broadcast %75 : vector<1x32xf32> to vector<8x32xf32>
    %96 = arith.mulf %94, %95 : vector<8x32xf32>
    %97 = vector.broadcast %76 : vector<1x32xf32> to vector<8x32xf32>
    %98 = arith.addf %96, %97 : vector<8x32xf32>
    %c0_51 = arith.constant 0 : index
    %c0_52 = arith.constant 0 : index
    %99 = vector.load %arg14[%c0_51, %c0_52] : memref<32x32xf32, #tpu.memory_space<vmem>>, vector<32x32xf32>
    %c0_53 = arith.constant 0 : index
    %c0_54 = arith.constant 0 : index
    %100 = vector.load %arg15[%c0_53, %c0_54] : memref<1x32xf32, #tpu.memory_space<vmem>>, vector<1x32xf32>
    %cst_55 = arith.constant dense<0.000000e+00> : vector<8x32xf32>
    %101 = tpu.matmul %98, %99, %cst_55 {dimension_numbers = #tpu.dot_dimension_numbers<[1], [0], [0], [1], [0, 0, 1, 1], [], []>} : vector<8x32xf32>, vector<32x32xf32>, vector<8x32xf32> -> vector<8x32xf32>
    %102 = vector.broadcast %100 : vector<1x32xf32> to vector<8x32xf32>
    %103 = arith.addf %101, %102 : vector<8x32xf32>
    %104 = arith.addf %74, %103 : vector<8x32xf32>
    %c0_56 = arith.constant 0 : index
    %c0_57 = arith.constant 0 : index
    %105 = vector.load %arg18[%c0_56, %c0_57] : memref<1x32xf32, #tpu.memory_space<vmem>>, vector<1x32xf32>
    %c0_58 = arith.constant 0 : index
    %c0_59 = arith.constant 0 : index
    %106 = vector.load %arg19[%c0_58, %c0_59] : memref<1x32xf32, #tpu.memory_space<vmem>>, vector<1x32xf32>
    %cst_60 = arith.constant dense<0.000000e+00> : vector<8xf32>
    %107 = vector.multi_reduction <add>, %104, %cst_60 [1] : vector<8x32xf32> to vector<8xf32>
    %108 = vector.shape_cast %107 : vector<8xf32> to vector<8x1xf32>
    %cst_61 = arith.constant 3.200000e+01 : f32
    %109 = vector.broadcast %cst_61 : f32 to vector<8x1xf32>
    %110 = arith.divf %108, %109 : vector<8x1xf32>
    %111 = vector.broadcast %110 : vector<8x1xf32> to vector<8x32xf32>
    %112 = arith.subf %104, %111 : vector<8x32xf32>
    %113 = arith.mulf %112, %112 : vector<8x32xf32>
    %cst_62 = arith.constant dense<0.000000e+00> : vector<8xf32>
    %114 = vector.multi_reduction <add>, %113, %cst_62 [1] : vector<8x32xf32> to vector<8xf32>
    %115 = vector.shape_cast %114 : vector<8xf32> to vector<8x1xf32>
    %cst_63 = arith.constant 3.200000e+01 : f32
    %116 = vector.broadcast %cst_63 : f32 to vector<8x1xf32>
    %117 = arith.divf %115, %116 : vector<8x1xf32>
    %118 = vector.broadcast %110 : vector<8x1xf32> to vector<8x32xf32>
    %119 = arith.subf %104, %118 : vector<8x32xf32>
    %cst_64 = arith.constant 9.99999974E-6 : f32
    %120 = vector.broadcast %cst_64 : f32 to vector<8x1xf32>
    %121 = arith.addf %117, %120 : vector<8x1xf32>
    %122 = math.rsqrt %121 : vector<8x1xf32>
    %123 = vector.broadcast %122 : vector<8x1xf32> to vector<8x32xf32>
    %124 = arith.mulf %119, %123 : vector<8x32xf32>
    %125 = vector.broadcast %105 : vector<1x32xf32> to vector<8x32xf32>
    %126 = arith.mulf %124, %125 : vector<8x32xf32>
    %127 = vector.broadcast %106 : vector<1x32xf32> to vector<8x32xf32>
    %128 = arith.addf %126, %127 : vector<8x32xf32>
    %c0_65 = arith.constant 0 : index
    %c0_66 = arith.constant 0 : index
    %129 = vector.load %arg20[%c0_65, %c0_66] : memref<32x32xf32, #tpu.memory_space<vmem>>, vector<32x32xf32>
    %c0_67 = arith.constant 0 : index
    %c0_68 = arith.constant 0 : index
    %130 = vector.load %arg21[%c0_67, %c0_68] : memref<1x32xf32, #tpu.memory_space<vmem>>, vector<1x32xf32>
    %cst_69 = arith.constant dense<0.000000e+00> : vector<8x32xf32>
    %131 = tpu.matmul %128, %129, %cst_69 {dimension_numbers = #tpu.dot_dimension_numbers<[1], [0], [0], [1], [0, 0, 1, 1], [], []>} : vector<8x32xf32>, vector<32x32xf32>, vector<8x32xf32> -> vector<8x32xf32>
    %132 = vector.broadcast %130 : vector<1x32xf32> to vector<8x32xf32>
    %133 = arith.addf %131, %132 : vector<8x32xf32>
    %cst_70 = arith.constant 0.000000e+00 : f32
    %134 = vector.broadcast %cst_70 : f32 to vector<8x32xf32>
    %135 = arith.maximumf %133, %134 : vector<8x32xf32>
    %c0_71 = arith.constant 0 : index
    %c0_72 = arith.constant 0 : index
    %136 = vector.load %arg22[%c0_71, %c0_72] : memref<32x32xf32, #tpu.memory_space<vmem>>, vector<32x32xf32>
    %c0_73 = arith.constant 0 : index
    %c0_74 = arith.constant 0 : index
    %137 = vector.load %arg23[%c0_73, %c0_74] : memref<1x32xf32, #tpu.memory_space<vmem>>, vector<1x32xf32>
    %cst_75 = arith.constant dense<0.000000e+00> : vector<8x32xf32>
    %138 = tpu.matmul %135, %136, %cst_75 {dimension_numbers = #tpu.dot_dimension_numbers<[1], [0], [0], [1], [0, 0, 1, 1], [], []>} : vector<8x32xf32>, vector<32x32xf32>, vector<8x32xf32> -> vector<8x32xf32>
    %139 = vector.broadcast %137 : vector<1x32xf32> to vector<8x32xf32>
    %140 = arith.addf %138, %139 : vector<8x32xf32>
    %141 = arith.addf %104, %140 : vector<8x32xf32>
    %c0_76 = arith.constant 0 : index
    %c0_77 = arith.constant 0 : index
    %142 = vector.load %arg24[%c0_76, %c0_77] : memref<32x32xf32, #tpu.memory_space<vmem>>, vector<32x32xf32>
    %c0_78 = arith.constant 0 : index
    %c0_79 = arith.constant 0 : index
    %143 = vector.load %arg25[%c0_78, %c0_79] : memref<1x32xf32, #tpu.memory_space<vmem>>, vector<1x32xf32>
    %cst_80 = arith.constant dense<0.000000e+00> : vector<8x32xf32>
    %144 = tpu.matmul %141, %142, %cst_80 {dimension_numbers = #tpu.dot_dimension_numbers<[1], [0], [0], [1], [0, 0, 1, 1], [], []>} : vector<8x32xf32>, vector<32x32xf32>, vector<8x32xf32> -> vector<8x32xf32>
    %145 = vector.broadcast %143 : vector<1x32xf32> to vector<8x32xf32>
    %146 = arith.addf %144, %145 : vector<8x32xf32>
    %cst_81 = arith.constant 0.000000e+00 : f32
    %147 = vector.broadcast %cst_81 : f32 to vector<8x32xf32>
    %148 = arith.maximumf %146, %147 : vector<8x32xf32>
    %c0_82 = arith.constant 0 : index
    %c0_83 = arith.constant 0 : index
    %149 = vector.load %arg26[%c0_82, %c0_83] : memref<32x32xf32, #tpu.memory_space<vmem>>, vector<32x32xf32>
    %c0_84 = arith.constant 0 : index
    %c0_85 = arith.constant 0 : index
    %150 = vector.load %arg27[%c0_84, %c0_85] : memref<1x32xf32, #tpu.memory_space<vmem>>, vector<1x32xf32>
    %cst_86 = arith.constant dense<0.000000e+00> : vector<8x32xf32>
    %151 = tpu.matmul %148, %149, %cst_86 {dimension_numbers = #tpu.dot_dimension_numbers<[1], [0], [0], [1], [0, 0, 1, 1], [], []>} : vector<8x32xf32>, vector<32x32xf32>, vector<8x32xf32> -> vector<8x32xf32>
    %152 = vector.broadcast %150 : vector<1x32xf32> to vector<8x32xf32>
    %153 = arith.addf %151, %152 : vector<8x32xf32>
    %cst_87 = arith.constant 0.000000e+00 : f32
    %154 = vector.broadcast %cst_87 : f32 to vector<8x32xf32>
    %155 = arith.maximumf %153, %154 : vector<8x32xf32>
    %c0_88 = arith.constant 0 : index
    %c0_89 = arith.constant 0 : index
    %156 = vector.load %arg28[%c0_88, %c0_89] : memref<32x128xf32, #tpu.memory_space<vmem>>, vector<32x128xf32>
    %c0_90 = arith.constant 0 : index
    %c0_91 = arith.constant 0 : index
    %157 = vector.load %arg29[%c0_90, %c0_91] : memref<1x128xf32, #tpu.memory_space<vmem>>, vector<1x128xf32>
    %cst_92 = arith.constant dense<0.000000e+00> : vector<8x128xf32>
    %158 = tpu.matmul %155, %156, %cst_92 {dimension_numbers = #tpu.dot_dimension_numbers<[1], [0], [0], [1], [0, 0, 1, 1], [], []>} : vector<8x32xf32>, vector<32x128xf32>, vector<8x128xf32> -> vector<8x128xf32>
    %159 = vector.broadcast %157 : vector<1x128xf32> to vector<8x128xf32>
    %160 = arith.addf %158, %159 : vector<8x128xf32>
    %c0_93 = arith.constant 0 : index
    %c0_94 = arith.constant 0 : index
    %161 = vector.load %arg30[%c0_93, %c0_94] : memref<8x128xf32, #tpu.memory_space<vmem>>, vector<8x128xf32>
    tpu.vector_store %arg30[%c0_93, %c0_94], %160 {strides = array<i32>} : memref<8x128xf32, #tpu.memory_space<vmem>>, vector<8x128xf32>,
    return
  }
  func.func @transform_0(%arg0: i32) -> (i32, i32) {
    %c0_i32 = arith.constant 0 : i32
    %c0_i32_0 = arith.constant 0 : i32
    return %arg0, %c0_i32 : i32, i32
  }
  func.func @transform_1(%arg0: i32) -> (i32, i32) {
    %c0_i32 = arith.constant 0 : i32
    %c0_i32_0 = arith.constant 0 : i32
    return %arg0, %c0_i32 : i32, i32
  }
  func.func @transform_2(%arg0: i32) -> (i32, i32) {
    %c0_i32 = arith.constant 0 : i32
    %c0_i32_0 = arith.constant 0 : i32
    %c0_i32_1 = arith.constant 0 : i32
    return %c0_i32, %c0_i32_0 : i32, i32
  }
  func.func @transform_3(%arg0: i32) -> (i32, i32) {
    %c0_i32 = arith.constant 0 : i32
    %c0_i32_0 = arith.constant 0 : i32
    %c0_i32_1 = arith.constant 0 : i32
    return %c0_i32, %c0_i32_0 : i32, i32
  }
  func.func @transform_4(%arg0: i32) -> (i32, i32) {
    %c0_i32 = arith.constant 0 : i32
    %c0_i32_0 = arith.constant 0 : i32
    %c0_i32_1 = arith.constant 0 : i32
    return %c0_i32, %c0_i32_0 : i32, i32
  }
  func.func @transform_5(%arg0: i32) -> (i32, i32) {
    %c0_i32 = arith.constant 0 : i32
    %c0_i32_0 = arith.constant 0 : i32
    %c0_i32_1 = arith.constant 0 : i32
    return %c0_i32, %c0_i32_0 : i32, i32
  }
  func.func @transform_6(%arg0: i32) -> (i32, i32) {
    %c0_i32 = arith.constant 0 : i32
    %c0_i32_0 = arith.constant 0 : i32
    %c0_i32_1 = arith.constant 0 : i32
    return %c0_i32, %c0_i32_0 : i32, i32
  }
  func.func @transform_7(%arg0: i32) -> (i32, i32) {
    %c0_i32 = arith.constant 0 : i32
    %c0_i32_0 = arith.constant 0 : i32
    %c0_i32_1 = arith.constant 0 : i32
    return %c0_i32, %c0_i32_0 : i32, i32
  }
  func.func @transform_8(%arg0: i32) -> (i32, i32) {
    %c0_i32 = arith.constant 0 : i32
    %c0_i32_0 = arith.constant 0 : i32
    %c0_i32_1 = arith.constant 0 : i32
    return %c0_i32, %c0_i32_0 : i32, i32
  }
  func.func @transform_9(%arg0: i32) -> (i32, i32) {
    %c0_i32 = arith.constant 0 : i32
    %c0_i32_0 = arith.constant 0 : i32
    %c0_i32_1 = arith.constant 0 : i32
    return %c0_i32, %c0_i32_0 : i32, i32
  }
  func.func @transform_10(%arg0: i32) -> (i32, i32) {
    %c0_i32 = arith.constant 0 : i32
    %c0_i32_0 = arith.constant 0 : i32
    %c0_i32_1 = arith.constant 0 : i32
    return %c0_i32, %c0_i32_0 : i32, i32
  }
  func.func @transform_11(%arg0: i32) -> (i32, i32) {
    %c0_i32 = arith.constant 0 : i32
    %c0_i32_0 = arith.constant 0 : i32
    %c0_i32_1 = arith.constant 0 : i32
    return %c0_i32, %c0_i32_0 : i32, i32
  }
  func.func @transform_12(%arg0: i32) -> (i32, i32) {
    %c0_i32 = arith.constant 0 : i32
    %c0_i32_0 = arith.constant 0 : i32
    %c0_i32_1 = arith.constant 0 : i32
    return %c0_i32, %c0_i32_0 : i32, i32
  }
  func.func @transform_13(%arg0: i32) -> (i32, i32) {
    %c0_i32 = arith.constant 0 : i32
    %c0_i32_0 = arith.constant 0 : i32
    %c0_i32_1 = arith.constant 0 : i32
    return %c0_i32, %c0_i32_0 : i32, i32
  }
  func.func @transform_14(%arg0: i32) -> (i32, i32) {
    %c0_i32 = arith.constant 0 : i32
    %c0_i32_0 = arith.constant 0 : i32
    %c0_i32_1 = arith.constant 0 : i32
    return %c0_i32, %c0_i32_0 : i32, i32
  }
  func.func @transform_15(%arg0: i32) -> (i32, i32) {
    %c0_i32 = arith.constant 0 : i32
    %c0_i32_0 = arith.constant 0 : i32
    %c0_i32_1 = arith.constant 0 : i32
    return %c0_i32, %c0_i32_0 : i32, i32
  }
  func.func @transform_16(%arg0: i32) -> (i32, i32) {
    %c0_i32 = arith.constant 0 : i32
    %c0_i32_0 = arith.constant 0 : i32
    %c0_i32_1 = arith.constant 0 : i32
    return %c0_i32, %c0_i32_0 : i32, i32
  }
  func.func @transform_17(%arg0: i32) -> (i32, i32) {
    %c0_i32 = arith.constant 0 : i32
    %c0_i32_0 = arith.constant 0 : i32
    %c0_i32_1 = arith.constant 0 : i32
    return %c0_i32, %c0_i32_0 : i32, i32
  }
  func.func @transform_18(%arg0: i32) -> (i32, i32) {
    %c0_i32 = arith.constant 0 : i32
    %c0_i32_0 = arith.constant 0 : i32
    %c0_i32_1 = arith.constant 0 : i32
    return %c0_i32, %c0_i32_0 : i32, i32
  }
  func.func @transform_19(%arg0: i32) -> (i32, i32) {
    %c0_i32 = arith.constant 0 : i32
    %c0_i32_0 = arith.constant 0 : i32
    %c0_i32_1 = arith.constant 0 : i32
    return %c0_i32, %c0_i32_0 : i32, i32
  }
  func.func @transform_20(%arg0: i32) -> (i32, i32) {
    %c0_i32 = arith.constant 0 : i32
    %c0_i32_0 = arith.constant 0 : i32
    %c0_i32_1 = arith.constant 0 : i32
    return %c0_i32, %c0_i32_0 : i32, i32
  }
  func.func @transform_21(%arg0: i32) -> (i32, i32) {
    %c0_i32 = arith.constant 0 : i32
    %c0_i32_0 = arith.constant 0 : i32
    %c0_i32_1 = arith.constant 0 : i32
    return %c0_i32, %c0_i32_0 : i32, i32
  }
  func.func @transform_22(%arg0: i32) -> (i32, i32) {
    %c0_i32 = arith.constant 0 : i32
    %c0_i32_0 = arith.constant 0 : i32
    %c0_i32_1 = arith.constant 0 : i32
    return %c0_i32, %c0_i32_0 : i32, i32
  }
  func.func @transform_23(%arg0: i32) -> (i32, i32) {
    %c0_i32 = arith.constant 0 : i32
    %c0_i32_0 = arith.constant 0 : i32
    %c0_i32_1 = arith.constant 0 : i32
    return %c0_i32, %c0_i32_0 : i32, i32
  }
  func.func @transform_24(%arg0: i32) -> (i32, i32) {
    %c0_i32 = arith.constant 0 : i32
    %c0_i32_0 = arith.constant 0 : i32
    %c0_i32_1 = arith.constant 0 : i32
    return %c0_i32, %c0_i32_0 : i32, i32
  }
  func.func @transform_25(%arg0: i32) -> (i32, i32) {
    %c0_i32 = arith.constant 0 : i32
    %c0_i32_0 = arith.constant 0 : i32
    %c0_i32_1 = arith.constant 0 : i32
    return %c0_i32, %c0_i32_0 : i32, i32
  }
  func.func @transform_26(%arg0: i32) -> (i32, i32) {
    %c0_i32 = arith.constant 0 : i32
    %c0_i32_0 = arith.constant 0 : i32
    %c0_i32_1 = arith.constant 0 : i32
    return %c0_i32, %c0_i32_0 : i32, i32
  }
  func.func @transform_27(%arg0: i32) -> (i32, i32) {
    %c0_i32 = arith.constant 0 : i32
    %c0_i32_0 = arith.constant 0 : i32
    %c0_i32_1 = arith.constant 0 : i32
    return %c0_i32, %c0_i32_0 : i32, i32
  }
  func.func @transform_28(%arg0: i32) -> (i32, i32) {
    %c0_i32 = arith.constant 0 : i32
    %c0_i32_0 = arith.constant 0 : i32
    %c0_i32_1 = arith.constant 0 : i32
    return %c0_i32, %c0_i32_0 : i32, i32
  }
  func.func @transform_29(%arg0: i32) -> (i32, i32) {
    %c0_i32 = arith.constant 0 : i32
    %c0_i32_0 = arith.constant 0 : i32
    return %arg0, %c0_i32 : i32, i32
  }
}

</mosaic_0001>

<llo_original>
// kernel: tpu_custom_call.1
$region0: #{tpu_custom_call.1}
  #allocation0 [shape = 'u32[]', space=smem, size = 0x4, offset = 0x4, fixed_abs, tag = 'smem constant byte address 0x4 - core index']
  #allocation1 [shape = 'u32[144,128]{1,0:T(1,128)}', space=vmem, size = 0x12000, scoped, tag = 'internal scratch']
  %s0 = inlined_call_operand.smem [shape: u32[30], index: -1, kind: input, shape index: {}]
  %s1 = sld [smem:[%s0]]
  %s2 = scalar_lea.smem %s0, 1
  %s3 = sld [smem:[%s2]]
  %s4 = scalar_lea.smem %s0, 2
  %s5 = sld [smem:[%s4]]
  %s6 = scalar_lea.smem %s0, 3
  %s7 = sld [smem:[%s6]]
  %s8 = scalar_lea.smem %s0, 4
  %s9 = sld [smem:[%s8]]
  %s10 = scalar_lea.smem %s0, 5
  %s11 = sld [smem:[%s10]]
  %s12 = scalar_lea.smem %s0, 6
  %s13 = sld [smem:[%s12]]
  %s14 = scalar_lea.smem %s0, 7
  %s15 = sld [smem:[%s14]]
  %s16 = scalar_lea.smem %s0, 8
  %s17 = sld [smem:[%s16]]
  %s18 = scalar_lea.smem %s0, 9
  %s19 = sld [smem:[%s18]]
  %s20 = scalar_lea.smem %s0, 10
  %s21 = sld [smem:[%s20]]
  %s22 = scalar_lea.smem %s0, 11
  %s23 = sld [smem:[%s22]]
  %s24 = scalar_lea.smem %s0, 12
  %s25 = sld [smem:[%s24]]
  %s26 = scalar_lea.smem %s0, 13
  %s27 = sld [smem:[%s26]]
  %s28 = scalar_lea.smem %s0, 14
  %s29 = sld [smem:[%s28]]
  %s30 = scalar_lea.smem %s0, 15
  %s31 = sld [smem:[%s30]]
  %s32 = scalar_lea.smem %s0, 16
  %s33 = sld [smem:[%s32]]
  %s34 = scalar_lea.smem %s0, 17
  %s35 = sld [smem:[%s34]]
  %s36 = scalar_lea.smem %s0, 18
  %s37 = sld [smem:[%s36]]
  %s38 = scalar_lea.smem %s0, 19
  %s39 = sld [smem:[%s38]]
  %s40 = scalar_lea.smem %s0, 20
  %s41 = sld [smem:[%s40]]
  %s42 = scalar_lea.smem %s0, 21
  %s43 = sld [smem:[%s42]]
  %s44 = scalar_lea.smem %s0, 22
  %s45 = sld [smem:[%s44]]
  %s46 = scalar_lea.smem %s0, 23
  %s47 = sld [smem:[%s46]]
  %s48 = scalar_lea.smem %s0, 24
  %s49 = sld [smem:[%s48]]
  %s50 = scalar_lea.smem %s0, 25
  %s51 = sld [smem:[%s50]]
  %s52 = scalar_lea.smem %s0, 26
  %s53 = sld [smem:[%s52]]
  %s54 = scalar_lea.smem %s0, 27
  %s55 = sld [smem:[%s54]]
  %s56 = scalar_lea.smem %s0, 28
  %s57 = sld [smem:[%s56]]
  %s58 = scalar_lea.smem %s0, 29
  %s59 = sld [smem:[%s58]]
  %s60 = sld [smem:[#allocation0]]
  $region210: #{tpu_custom_call.1} parent=0
    _
  %s62 = ssub.s32 1, %s60
  %s63 = scalar_select 0, %s62, %s60
  $region1: #{tpu_custom_call.1} parent=0
    #allocation2 [shape = 'u8[4096]{0}', space=vmem, size = 0x1000, scoped, tag = 'input window, operand 0, single buffered']
    #allocation3 [shape = 's32[1]{0}', space=sflag, size = 0x4, scoped, tag = 'scoped memory for tpu_custom_call.1']
    #allocation4 [shape = 's32[1]{0}', space=sflag, size = 0x4, scoped, tag = 'scoped memory for tpu_custom_call.1']
    #allocation5 [shape = 'u8[4096]{0}', space=vmem, size = 0x1000, scoped, tag = 'input window, operand 1, single buffered']
    #allocation6 [shape = 's32[1]{0}', space=sflag, size = 0x4, scoped, tag = 'scoped memory for tpu_custom_call.1']
    #allocation7 [shape = 'u8[8192]{0}', space=vmem, size = 0x2000, scoped, tag = 'input window, operand 2, single buffered']
    #allocation8 [shape = 'u8[4096]{0}', space=vmem, size = 0x1000, scoped, tag = 'input window, operand 4, single buffered']
    #allocation9 [shape = 's32[1]{0}', space=sflag, size = 0x4, scoped, tag = 'scoped memory for tpu_custom_call.1']
    #allocation10 [shape = 'u8[512]{0}', space=vmem, size = 0x400, scoped, tag = 'input window, operand 6, single buffered']
    #allocation11 [shape = 'u8[512]{0}', space=vmem, size = 0x400, scoped, tag = 'input window, operand 7, single buffered']
    #allocation12 [shape = 's32[1]{0}', space=sflag, size = 0x4, scoped, tag = 'scoped memory for tpu_custom_call.1']
    #allocation13 [shape = 'u8[16384]{0}', space=vmem, size = 0x4000, scoped, tag = 'input window, operand 8, single buffered']
    #allocation14 [shape = 'u8[512]{0}', space=vmem, size = 0x400, scoped, tag = 'input window, operand 9, single buffered']
    #allocation15 [shape = 's32[1]{0}', space=sflag, size = 0x4, scoped, tag = 'scoped memory for tpu_custom_call.1']
    #allocation16 [shape = 'u8[16384]{0}', space=vmem, size = 0x4000, scoped, tag = 'input window, operand 10, single buffered']
    #allocation17 [shape = 'u8[16384]{0}', space=vmem, size = 0x4000, scoped, tag = 'input window, operand 11, single buffered']
    #allocation18 [shape = 's32[1]{0}', space=sflag, size = 0x4, scoped, tag = 'scoped memory for tpu_custom_call.1']
    #allocation19 [shape = 'u8[512]{0}', space=vmem, size = 0x400, scoped, tag = 'input window, operand 12, single buffered']
    #allocation20 [shape = 'u8[16384]{0}', space=vmem, size = 0x4000, scoped, tag = 'input window, operand 13, single buffered']
    #allocation21 [shape = 's32[1]{0}', space=sflag, size = 0x4, scoped, tag = 'scoped memory for tpu_custom_call.1']
    #allocation22 [shape = 'u8[512]{0}', space=vmem, size = 0x400, scoped, tag = 'input window, operand 14, single buffered']
    #allocation23 [shape = 'u8[512]{0}', space=vmem, size = 0x400, scoped, tag = 'input window, operand 15, single buffered']
    #allocation24 [shape = 's32[1]{0}', space=sflag, size = 0x4, scoped, tag = 'scoped memory for tpu_custom_call.1']
    #allocation25 [shape = 'u8[512]{0}', space=vmem, size = 0x400, scoped, tag = 'input window, operand 16, single buffered']
    #allocation26 [shape = 'u8[512]{0}', space=vmem, size = 0x400, scoped, tag = 'input window, operand 17, single buffered']
    #allocation27 [shape = 's32[1]{0}', space=sflag, size = 0x4, scoped, tag = 'scoped memory for tpu_custom_call.1']
    #allocation28 [shape = 'u8[512]{0}', space=vmem, size = 0x400, scoped, tag = 'input window, operand 18, single buffered']
    #allocation29 [shape = 'u8[16384]{0}', space=vmem, size = 0x4000, scoped, tag = 'input window, operand 21, single buffered']
    #allocation30 [shape = 's32[1]{0}', space=sflag, size = 0x4, scoped, tag = 'scoped memory for tpu_custom_call.1']
    #allocation31 [shape = 'u8[16384]{0}', space=vmem, size = 0x4000, scoped, tag = 'input window, operand 23, single buffered']
    #allocation32 [shape = 'u8[16384]{0}', space=vmem, size = 0x4000, scoped, tag = 'input window, operand 25, single buffered']
    #allocation33 [shape = 's32[1]{0}', space=sflag, size = 0x4, scoped, tag = 'scoped memory for tpu_custom_call.1']
    #allocation34 [shape = 'u8[16384]{0}', space=vmem, size = 0x4000, scoped, tag = 'input window, operand 27, single buffered']
    #allocation35 [shape = 'u8[4096]{0}', space=vmem, size = 0x1000, scoped, tag = 'output window, operand 0, single buffered']
    %64 = vsyncpa [#allocation3], 0
    %65 = vsyncpa [#allocation6], 0
    %66 = vsyncpa [#allocation9], 0
    %67 = vsyncpa [#allocation12], 0
    %68 = vsyncpa [#allocation15], 0
    %69 = vsyncpa [#allocation18], 0
    %70 = vsyncpa [#allocation21], 0
    %71 = vsyncpa [#allocation24], 0
    %72 = vsyncpa [#allocation27], 0
    %73 = vsyncpa [#allocation30], 0
    %74 = vsyncpa [#allocation33], 0
    %75 = vsyncpa [#allocation4], 0
    // Predicated region
    $region2: #{tpu_custom_call.1} parent=1 // pred_check
      _
    $region3: #{tpu_custom_call.1} parent=1 // pred_check_branch
      %77 = sbr.rel (0) target = $region5
    $region4: #{tpu_custom_call.1} parent=1 // pred_region
      %s79 = ssub.s32 128, 128
      %80 = vsyncadd [#allocation3], %s79
      %s82 = sshll.u32 [#allocation2], 4
      %s83 = int_to_ptr.vmem [resolvable:$true] %s82
      %85 = dma.hbm_to_vmem [thread:$0]  %s1, 128, %s83, [#allocation3]
    $region5: #{tpu_custom_call.1} parent=1 // pred_fallthru
      _
    // Predicated region
    $region6: #{tpu_custom_call.1} parent=1 // pred_check
      _
    $region7: #{tpu_custom_call.1} parent=1 // pred_check_branch
      %87 = sbr.rel (0) target = $region9
    $region8: #{tpu_custom_call.1} parent=1 // pred_region
      %s89 = ssub.s32 128, 128
      %90 = vsyncadd [#allocation6], %s89
      %s92 = sshll.u32 [#allocation5], 4
      %s93 = int_to_ptr.vmem [resolvable:$true] %s92
      %95 = dma.hbm_to_vmem [thread:$0]  %s3, 128, %s93, [#allocation6]
    $region9: #{tpu_custom_call.1} parent=1 // pred_fallthru
      _
    // Predicated region
    $region10: #{tpu_custom_call.1} parent=1 // pred_check
      _
    $region11: #{tpu_custom_call.1} parent=1 // pred_check_branch
      %97 = sbr.rel (0) target = $region13
    $region12: #{tpu_custom_call.1} parent=1 // pred_region
      %s99 = ssub.s32 256, 256
      %100 = vsyncadd [#allocation6], %s99
      %s101 = sshll.u32 [#allocation7], 4
      %s102 = int_to_ptr.vmem [resolvable:$true] %s101
      %107 = dma.hbm_to_vmem [thread:$0]  %s5, 256, %s102, [#allocation6], 128, 128, 8
    $region13: #{tpu_custom_call.1} parent=1 // pred_fallthru
      _
    // Predicated region
    $region14: #{tpu_custom_call.1} parent=1 // pred_check
      _
    $region15: #{tpu_custom_call.1} parent=1 // pred_check_branch
      %109 = sbr.rel (0) target = $region17
    $region16: #{tpu_custom_call.1} parent=1 // pred_region
      _
    $region17: #{tpu_custom_call.1} parent=1 // pred_fallthru
      _
    // Predicated region
    $region18: #{tpu_custom_call.1} parent=1 // pred_check
      _
    $region19: #{tpu_custom_call.1} parent=1 // pred_check_branch
      %111 = sbr.rel (0) target = $region21
    $region20: #{tpu_custom_call.1} parent=1 // pred_region
      %s113 = ssub.s32 128, 128
      %114 = vsyncadd [#allocation9], %s113
      %s116 = sshll.u32 [#allocation8], 4
      %s117 = int_to_ptr.vmem [resolvable:$true] %s116
      %119 = dma.hbm_to_vmem [thread:$0]  %s9, 128, %s117, [#allocation9]
    $region21: #{tpu_custom_call.1} parent=1 // pred_fallthru
      _
    // Predicated region
    $region22: #{tpu_custom_call.1} parent=1 // pred_check
      _
    $region23: #{tpu_custom_call.1} parent=1 // pred_check_branch
      %121 = sbr.rel (0) target = $region25
    $region24: #{tpu_custom_call.1} parent=1 // pred_region
      _
    $region25: #{tpu_custom_call.1} parent=1 // pred_fallthru
      _
    // Predicated region
    $region26: #{tpu_custom_call.1} parent=1 // pred_check
      _
    $region27: #{tpu_custom_call.1} parent=1 // pred_check_branch
      %123 = sbr.rel (0) target = $region29
    $region28: #{tpu_custom_call.1} parent=1 // pred_region
      %s125 = ssub.s32 16, 16
      %126 = vsyncadd [#allocation9], %s125
      %s128 = sshll.u32 [#allocation10], 4
      %s129 = int_to_ptr.vmem [resolvable:$true] %s128
      %131 = dma.hbm_to_vmem [thread:$0]  %s13, 16, %s129, [#allocation9]
    $region29: #{tpu_custom_call.1} parent=1 // pred_fallthru
      _
    // Predicated region
    $region30: #{tpu_custom_call.1} parent=1 // pred_check
      _
    $region31: #{tpu_custom_call.1} parent=1 // pred_check_branch
      %133 = sbr.rel (0) target = $region33
    $region32: #{tpu_custom_call.1} parent=1 // pred_region
      %s135 = ssub.s32 16, 16
      %136 = vsyncadd [#allocation12], %s135
      %s138 = sshll.u32 [#allocation11], 4
      %s139 = int_to_ptr.vmem [resolvable:$true] %s138
      %141 = dma.hbm_to_vmem [thread:$0]  %s15, 16, %s139, [#allocation12]
    $region33: #{tpu_custom_call.1} parent=1 // pred_fallthru
      _
    // Predicated region
    $region34: #{tpu_custom_call.1} parent=1 // pred_check
      _
    $region35: #{tpu_custom_call.1} parent=1 // pred_check_branch
      %143 = sbr.rel (0) target = $region37
    $region36: #{tpu_custom_call.1} parent=1 // pred_region
      %s145 = ssub.s32 512, 512
      %146 = vsyncadd [#allocation12], %s145
      %s147 = sshll.u32 [#allocation13], 4
      %s148 = int_to_ptr.vmem [resolvable:$true] %s147
      %153 = dma.hbm_to_vmem [thread:$0]  %s17, 512, %s148, [#allocation12], 128, 128, 8
    $region37: #{tpu_custom_call.1} parent=1 // pred_fallthru
      _
    // Predicated region
    $region38: #{tpu_custom_call.1} parent=1 // pred_check
      _
    $region39: #{tpu_custom_call.1} parent=1 // pred_check_branch
      %155 = sbr.rel (0) target = $region41
    $region40: #{tpu_custom_call.1} parent=1 // pred_region
      %s157 = ssub.s32 16, 16
      %158 = vsyncadd [#allocation15], %s157
      %s160 = sshll.u32 [#allocation14], 4
      %s161 = int_to_ptr.vmem [resolvable:$true] %s160
      %163 = dma.hbm_to_vmem [thread:$0]  %s19, 16, %s161, [#allocation15]
    $region41: #{tpu_custom_call.1} parent=1 // pred_fallthru
      _
    // Predicated region
    $region42: #{tpu_custom_call.1} parent=1 // pred_check
      _
    $region43: #{tpu_custom_call.1} parent=1 // pred_check_branch
      %165 = sbr.rel (0) target = $region45
    $region44: #{tpu_custom_call.1} parent=1 // pred_region
      %s167 = ssub.s32 512, 512
      %168 = vsyncadd [#allocation15], %s167
      %s169 = sshll.u32 [#allocation16], 4
      %s170 = int_to_ptr.vmem [resolvable:$true] %s169
      %175 = dma.hbm_to_vmem [thread:$0]  %s21, 512, %s170, [#allocation15], 128, 128, 8
    $region45: #{tpu_custom_call.1} parent=1 // pred_fallthru
      _
    // Predicated region
    $region46: #{tpu_custom_call.1} parent=1 // pred_check
      _
    $region47: #{tpu_custom_call.1} parent=1 // pred_check_branch
      %177 = sbr.rel (0) target = $region49
    $region48: #{tpu_custom_call.1} parent=1 // pred_region
      %s179 = ssub.s32 512, 512
      %180 = vsyncadd [#allocation18], %s179
      %s181 = sshll.u32 [#allocation17], 4
      %s182 = int_to_ptr.vmem [resolvable:$true] %s181
      %187 = dma.hbm_to_vmem [thread:$0]  %s23, 512, %s182, [#allocation18], 128, 128, 8
    $region49: #{tpu_custom_call.1} parent=1 // pred_fallthru
      _
    // Predicated region
    $region50: #{tpu_custom_call.1} parent=1 // pred_check
      _
    $region51: #{tpu_custom_call.1} parent=1 // pred_check_branch
      %189 = sbr.rel (0) target = $region53
    $region52: #{tpu_custom_call.1} parent=1 // pred_region
      %s191 = ssub.s32 16, 16
      %192 = vsyncadd [#allocation18], %s191
      %s194 = sshll.u32 [#allocation19], 4
      %s195 = int_to_ptr.vmem [resolvable:$true] %s194
      %197 = dma.hbm_to_vmem [thread:$0]  %s25, 16, %s195, [#allocation18]
    $region53: #{tpu_custom_call.1} parent=1 // pred_fallthru
      _
    // Predicated region
    $region54: #{tpu_custom_call.1} parent=1 // pred_check
      _
    $region55: #{tpu_custom_call.1} parent=1 // pred_check_branch
      %199 = sbr.rel (0) target = $region57
    $region56: #{tpu_custom_call.1} parent=1 // pred_region
      %s201 = ssub.s32 512, 512
      %202 = vsyncadd [#allocation21], %s201
      %s203 = sshll.u32 [#allocation20], 4
      %s204 = int_to_ptr.vmem [resolvable:$true] %s203
      %209 = dma.hbm_to_vmem [thread:$0]  %s27, 512, %s204, [#allocation21], 128, 128, 8
    $region57: #{tpu_custom_call.1} parent=1 // pred_fallthru
      _
    // Predicated region
    $region58: #{tpu_custom_call.1} parent=1 // pred_check
      _
    $region59: #{tpu_custom_call.1} parent=1 // pred_check_branch
      %211 = sbr.rel (0) target = $region61
    $region60: #{tpu_custom_call.1} parent=1 // pred_region
      %s213 = ssub.s32 16, 16
      %214 = vsyncadd [#allocation21], %s213
      %s216 = sshll.u32 [#allocation22], 4
      %s217 = int_to_ptr.vmem [resolvable:$true] %s216
      %219 = dma.hbm_to_vmem [thread:$0]  %s29, 16, %s217, [#allocation21]
    $region61: #{tpu_custom_call.1} parent=1 // pred_fallthru
      _
    // Predicated region
    $region62: #{tpu_custom_call.1} parent=1 // pred_check
      _
    $region63: #{tpu_custom_call.1} parent=1 // pred_check_branch
      %221 = sbr.rel (0) target = $region65
    $region64: #{tpu_custom_call.1} parent=1 // pred_region
      %s223 = ssub.s32 16, 16
      %224 = vsyncadd [#allocation24], %s223
      %s226 = sshll.u32 [#allocation23], 4
      %s227 = int_to_ptr.vmem [resolvable:$true] %s226
      %229 = dma.hbm_to_vmem [thread:$0]  %s31, 16, %s227, [#allocation24]
    $region65: #{tpu_custom_call.1} parent=1 // pred_fallthru
      _
    // Predicated region
    $region66: #{tpu_custom_call.1} parent=1 // pred_check
      _
    $region67: #{tpu_custom_call.1} parent=1 // pred_check_branch
      %231 = sbr.rel (0) target = $region69
    $region68: #{tpu_custom_call.1} parent=1 // pred_region
      %s233 = ssub.s32 16, 16
      %234 = vsyncadd [#allocation24], %s233
      %s236 = sshll.u32 [#allocation25], 4
      %s237 = int_to_ptr.vmem [resolvable:$true] %s236
      %239 = dma.hbm_to_vmem [thread:$0]  %s33, 16, %s237, [#allocation24]
    $region69: #{tpu_custom_call.1} parent=1 // pred_fallthru
      _
    // Predicated region
    $region70: #{tpu_custom_call.1} parent=1 // pred_check
      _
    $region71: #{tpu_custom_call.1} parent=1 // pred_check_branch
      %241 = sbr.rel (0) target = $region73
    $region72: #{tpu_custom_call.1} parent=1 // pred_region
      %s243 = ssub.s32 16, 16
      %244 = vsyncadd [#allocation27], %s243
      %s246 = sshll.u32 [#allocation26], 4
      %s247 = int_to_ptr.vmem [resolvable:$true] %s246
      %249 = dma.hbm_to_vmem [thread:$0]  %s35, 16, %s247, [#allocation27]
    $region73: #{tpu_custom_call.1} parent=1 // pred_fallthru
      _
    // Predicated region
    $region74: #{tpu_custom_call.1} parent=1 // pred_check
      _
    $region75: #{tpu_custom_call.1} parent=1 // pred_check_branch
      %251 = sbr.rel (0) target = $region77
    $region76: #{tpu_custom_call.1} parent=1 // pred_region
      %s253 = ssub.s32 16, 16
      %254 = vsyncadd [#allocation27], %s253
      %s256 = sshll.u32 [#allocation28], 4
      %s257 = int_to_ptr.vmem [resolvable:$true] %s256
      %259 = dma.hbm_to_vmem [thread:$0]  %s37, 16, %s257, [#allocation27]
    $region77: #{tpu_custom_call.1} parent=1 // pred_fallthru
      _
    // Predicated region
    $region78: #{tpu_custom_call.1} parent=1 // pred_check
      _
    $region79: #{tpu_custom_call.1} parent=1 // pred_check_branch
      %261 = sbr.rel (0) target = $region81
    $region80: #{tpu_custom_call.1} parent=1 // pred_region
      _
    $region81: #{tpu_custom_call.1} parent=1 // pred_fallthru
      _
    // Predicated region
    $region82: #{tpu_custom_call.1} parent=1 // pred_check
      _
    $region83: #{tpu_custom_call.1} parent=1 // pred_check_branch
      %263 = sbr.rel (0) target = $region85
    $region84: #{tpu_custom_call.1} parent=1 // pred_region
      _
    $region85: #{tpu_custom_call.1} parent=1 // pred_fallthru
      _
    // Predicated region
    $region86: #{tpu_custom_call.1} parent=1 // pred_check
      _
    $region87: #{tpu_custom_call.1} parent=1 // pred_check_branch
      %265 = sbr.rel (0) target = $region89
    $region88: #{tpu_custom_call.1} parent=1 // pred_region
      %s267 = ssub.s32 512, 512
      %268 = vsyncadd [#allocation30], %s267
      %s269 = sshll.u32 [#allocation29], 4
      %s270 = int_to_ptr.vmem [resolvable:$true] %s269
      %275 = dma.hbm_to_vmem [thread:$0]  %s43, 512, %s270, [#allocation30], 128, 128, 8
    $region89: #{tpu_custom_call.1} parent=1 // pred_fallthru
      _
    // Predicated region
    $region90: #{tpu_custom_call.1} parent=1 // pred_check
      _
    $region91: #{tpu_custom_call.1} parent=1 // pred_check_branch
      %277 = sbr.rel (0) target = $region93
    $region92: #{tpu_custom_call.1} parent=1 // pred_region
      _
    $region93: #{tpu_custom_call.1} parent=1 // pred_fallthru
      _
    // Predicated region
    $region94: #{tpu_custom_call.1} parent=1 // pred_check
      _
    $region95: #{tpu_custom_call.1} parent=1 // pred_check_branch
      %279 = sbr.rel (0) target = $region97
    $region96: #{tpu_custom_call.1} parent=1 // pred_region
      %s281 = ssub.s32 512, 512
      %282 = vsyncadd [#allocation30], %s281
      %s283 = sshll.u32 [#allocation31], 4
      %s284 = int_to_ptr.vmem [resolvable:$true] %s283
      %289 = dma.hbm_to_vmem [thread:$0]  %s47, 512, %s284, [#allocation30], 128, 128, 8
    $region97: #{tpu_custom_call.1} parent=1 // pred_fallthru
      _
    // Predicated region
    $region98: #{tpu_custom_call.1} parent=1 // pred_check
      _
    $region99: #{tpu_custom_call.1} parent=1 // pred_check_branch
      %291 = sbr.rel (0) target = $region101
    $region100: #{tpu_custom_call.1} parent=1 // pred_region
      _
    $region101: #{tpu_custom_call.1} parent=1 // pred_fallthru
      _
    // Predicated region
    $region102: #{tpu_custom_call.1} parent=1 // pred_check
      _
    $region103: #{tpu_custom_call.1} parent=1 // pred_check_branch
      %293 = sbr.rel (0) target = $region105
    $region104: #{tpu_custom_call.1} parent=1 // pred_region
      %s295 = ssub.s32 512, 512
      %296 = vsyncadd [#allocation33], %s295
      %s297 = sshll.u32 [#allocation32], 4
      %s298 = int_to_ptr.vmem [resolvable:$true] %s297
      %303 = dma.hbm_to_vmem [thread:$0]  %s51, 512, %s298, [#allocation33], 128, 128, 8
    $region105: #{tpu_custom_call.1} parent=1 // pred_fallthru
      _
    // Predicated region
    $region106: #{tpu_custom_call.1} parent=1 // pred_check
      _
    $region107: #{tpu_custom_call.1} parent=1 // pred_check_branch
      %305 = sbr.rel (0) target = $region109
    $region108: #{tpu_custom_call.1} parent=1 // pred_region
      _
    $region109: #{tpu_custom_call.1} parent=1 // pred_fallthru
      _
    // Predicated region
    $region110: #{tpu_custom_call.1} parent=1 // pred_check
      _
    $region111: #{tpu_custom_call.1} parent=1 // pred_check_branch
      %307 = sbr.rel (0) target = $region113
    $region112: #{tpu_custom_call.1} parent=1 // pred_region
      %s309 = ssub.s32 512, 512
      %310 = vsyncadd [#allocation33], %s309
      %s311 = sshll.u32 [#allocation34], 4
      %s312 = int_to_ptr.vmem [resolvable:$true] %s311
      %317 = dma.hbm_to_vmem [thread:$0]  %s55, 512, %s312, [#allocation33], 128, 128, 8
    $region113: #{tpu_custom_call.1} parent=1 // pred_fallthru
      _
    // Predicated region
    $region114: #{tpu_custom_call.1} parent=1 // pred_check
      _
    $region115: #{tpu_custom_call.1} parent=1 // pred_check_branch
      %319 = sbr.rel (0) target = $region117
    $region116: #{tpu_custom_call.1} parent=1 // pred_region
      _
    $region117: #{tpu_custom_call.1} parent=1 // pred_fallthru
      _
    // Predicated region
    $region118: #{tpu_custom_call.1} parent=1 // pred_check
      _
    $region119: #{tpu_custom_call.1} parent=1 // pred_check_branch
      %321 = sbr.rel (0) target = $region121
    $region120: #{tpu_custom_call.1} parent=1 // pred_region
      %322 = dma.done [#allocation3], 128
    $region121: #{tpu_custom_call.1} parent=1 // pred_fallthru
      _
    // Predicated region
    $region122: #{tpu_custom_call.1} parent=1 // pred_check
      _
    $region123: #{tpu_custom_call.1} parent=1 // pred_check_branch
      %324 = sbr.rel (0) target = $region125
    $region124: #{tpu_custom_call.1} parent=1 // pred_region
      %325 = dma.done [#allocation6], 128
    $region125: #{tpu_custom_call.1} parent=1 // pred_fallthru
      _
    // Predicated region
    $region126: #{tpu_custom_call.1} parent=1 // pred_check
      _
    $region127: #{tpu_custom_call.1} parent=1 // pred_check_branch
      %327 = sbr.rel (0) target = $region129
    $region128: #{tpu_custom_call.1} parent=1 // pred_region
      %328 = dma.done [#allocation6], 256
    $region129: #{tpu_custom_call.1} parent=1 // pred_fallthru
      _
    // Predicated region
    $region130: #{tpu_custom_call.1} parent=1 // pred_check
      _
    $region131: #{tpu_custom_call.1} parent=1 // pred_check_branch
      %330 = sbr.rel (0) target = $region133
    $region132: #{tpu_custom_call.1} parent=1 // pred_region
      %331 = dma.done [#allocation9], 128
    $region133: #{tpu_custom_call.1} parent=1 // pred_fallthru
      _
    // Predicated region
    $region134: #{tpu_custom_call.1} parent=1 // pred_check
      _
    $region135: #{tpu_custom_call.1} parent=1 // pred_check_branch
      %333 = sbr.rel (0) target = $region137
    $region136: #{tpu_custom_call.1} parent=1 // pred_region
      %334 = dma.done [#allocation9], 16
    $region137: #{tpu_custom_call.1} parent=1 // pred_fallthru
      _
    // Predicated region
    $region138: #{tpu_custom_call.1} parent=1 // pred_check
      _
    $region139: #{tpu_custom_call.1} parent=1 // pred_check_branch
      %336 = sbr.rel (0) target = $region141
    $region140: #{tpu_custom_call.1} parent=1 // pred_region
      %337 = dma.done [#allocation12], 16
    $region141: #{tpu_custom_call.1} parent=1 // pred_fallthru
      _
    // Predicated region
    $region142: #{tpu_custom_call.1} parent=1 // pred_check
      _
    $region143: #{tpu_custom_call.1} parent=1 // pred_check_branch
      %339 = sbr.rel (0) target = $region145
    $region144: #{tpu_custom_call.1} parent=1 // pred_region
      %340 = dma.done [#allocation12], 512
    $region145: #{tpu_custom_call.1} parent=1 // pred_fallthru
      _
    // Predicated region
    $region146: #{tpu_custom_call.1} parent=1 // pred_check
      _
    $region147: #{tpu_custom_call.1} parent=1 // pred_check_branch
      %342 = sbr.rel (0) target = $region149
    $region148: #{tpu_custom_call.1} parent=1 // pred_region
      %343 = dma.done [#allocation15], 16
    $region149: #{tpu_custom_call.1} parent=1 // pred_fallthru
      _
    // Predicated region
    $region150: #{tpu_custom_call.1} parent=1 // pred_check
      _
    $region151: #{tpu_custom_call.1} parent=1 // pred_check_branch
      %345 = sbr.rel (0) target = $region153
    $region152: #{tpu_custom_call.1} parent=1 // pred_region
      %346 = dma.done [#allocation15], 512
    $region153: #{tpu_custom_call.1} parent=1 // pred_fallthru
      _
    // Predicated region
    $region154: #{tpu_custom_call.1} parent=1 // pred_check
      _
    $region155: #{tpu_custom_call.1} parent=1 // pred_check_branch
      %348 = sbr.rel (0) target = $region157
    $region156: #{tpu_custom_call.1} parent=1 // pred_region
      %349 = dma.done [#allocation18], 512
    $region157: #{tpu_custom_call.1} parent=1 // pred_fallthru
      _
    // Predicated region
    $region158: #{tpu_custom_call.1} parent=1 // pred_check
      _
    $region159: #{tpu_custom_call.1} parent=1 // pred_check_branch
      %351 = sbr.rel (0) target = $region161
    $region160: #{tpu_custom_call.1} parent=1 // pred_region
      %352 = dma.done [#allocation18], 16
    $region161: #{tpu_custom_call.1} parent=1 // pred_fallthru
      _
    // Predicated region
    $region162: #{tpu_custom_call.1} parent=1 // pred_check
      _
    $region163: #{tpu_custom_call.1} parent=1 // pred_check_branch
      %354 = sbr.rel (0) target = $region165
    $region164: #{tpu_custom_call.1} parent=1 // pred_region
      %355 = dma.done [#allocation21], 512
    $region165: #{tpu_custom_call.1} parent=1 // pred_fallthru
      _
    // Predicated region
    $region166: #{tpu_custom_call.1} parent=1 // pred_check
      _
    $region167: #{tpu_custom_call.1} parent=1 // pred_check_branch
      %357 = sbr.rel (0) target = $region169
    $region168: #{tpu_custom_call.1} parent=1 // pred_region
      %358 = dma.done [#allocation21], 16
    $region169: #{tpu_custom_call.1} parent=1 // pred_fallthru
      _
    // Predicated region
    $region170: #{tpu_custom_call.1} parent=1 // pred_check
      _
    $region171: #{tpu_custom_call.1} parent=1 // pred_check_branch
      %360 = sbr.rel (0) target = $region173
    $region172: #{tpu_custom_call.1} parent=1 // pred_region
      %361 = dma.done [#allocation24], 16
    $region173: #{tpu_custom_call.1} parent=1 // pred_fallthru
      _
    // Predicated region
    $region174: #{tpu_custom_call.1} parent=1 // pred_check
      _
    $region175: #{tpu_custom_call.1} parent=1 // pred_check_branch
      %363 = sbr.rel (0) target = $region177
    $region176: #{tpu_custom_call.1} parent=1 // pred_region
      %364 = dma.done [#allocation24], 16
    $region177: #{tpu_custom_call.1} parent=1 // pred_fallthru
      _
    // Predicated region
    $region178: #{tpu_custom_call.1} parent=1 // pred_check
      _
    $region179: #{tpu_custom_call.1} parent=1 // pred_check_branch
      %366 = sbr.rel (0) target = $region181
    $region180: #{tpu_custom_call.1} parent=1 // pred_region
      %367 = dma.done [#allocation27], 16
    $region181: #{tpu_custom_call.1} parent=1 // pred_fallthru
      _
    // Predicated region
    $region182: #{tpu_custom_call.1} parent=1 // pred_check
      _
    $region183: #{tpu_custom_call.1} parent=1 // pred_check_branch
      %369 = sbr.rel (0) target = $region185
    $region184: #{tpu_custom_call.1} parent=1 // pred_region
      %370 = dma.done [#allocation27], 16
    $region185: #{tpu_custom_call.1} parent=1 // pred_fallthru
      _
    // Predicated region
    $region186: #{tpu_custom_call.1} parent=1 // pred_check
      _
    $region187: #{tpu_custom_call.1} parent=1 // pred_check_branch
      %372 = sbr.rel (0) target = $region189
    $region188: #{tpu_custom_call.1} parent=1 // pred_region
      %373 = dma.done [#allocation30], 512
    $region189: #{tpu_custom_call.1} parent=1 // pred_fallthru
      _
    // Predicated region
    $region190: #{tpu_custom_call.1} parent=1 // pred_check
      _
    $region191: #{tpu_custom_call.1} parent=1 // pred_check_branch
      %375 = sbr.rel (0) target = $region193
    $region192: #{tpu_custom_call.1} parent=1 // pred_region
      %376 = dma.done [#allocation30], 512
    $region193: #{tpu_custom_call.1} parent=1 // pred_fallthru
      _
    // Predicated region
    $region194: #{tpu_custom_call.1} parent=1 // pred_check
      _
    $region195: #{tpu_custom_call.1} parent=1 // pred_check_branch
      %378 = sbr.rel (0) target = $region197
    $region196: #{tpu_custom_call.1} parent=1 // pred_region
      %379 = dma.done [#allocation33], 512
    $region197: #{tpu_custom_call.1} parent=1 // pred_fallthru
      _
    // Predicated region
    $region198: #{tpu_custom_call.1} parent=1 // pred_check
      _
    $region199: #{tpu_custom_call.1} parent=1 // pred_check_branch
      %381 = sbr.rel (0) target = $region201
    $region200: #{tpu_custom_call.1} parent=1 // pred_region
      %382 = dma.done [#allocation33], 512
    $region201: #{tpu_custom_call.1} parent=1 // pred_fallthru
      _
    %v383 = vld [vmem:[#allocation2] sm:$0xff]
    %v384 = vld [vmem:[#allocation5] sm:$0xff]
    %v385 = vld [vmem:[#allocation7] sm:$0xff]
    %v386 = vld [vmem:[#allocation7 + $0x8] sm:$0xff]
    %v387 = vld [vmem:[%s7] sm:$0x1]
    %v389 = vlaneseq
    %v390 = vshrl.u32 %v389, 7
    %v391 = vsub.s32 0, %v390
    %v392 = vrot.slane %v387, %v391
    %vm394 = vcmask 130048
    %v396 = vsel %vm394, %v383, 0
    %398 = vmatprep.subr.mxu0 0.0
    %399 = vmatpush1.msra.mxu0 0.0
    %400 = vmatprep.subr.mxu0 0.0
    %401 = vmatpush1.msra.mxu0 0.0
    %402 = vmatprep.subr.mxu0 0.0
    %403 = vmatpush1.msra.mxu0 0.0
    %404 = vmatprep.subr.mxu0 0.0
    %405 = vmatpush1.msra.mxu0 0.0
    %406 = vmatprep.subr.mxu0 0.0
    %407 = vmatpush1.msra.mxu0 0.0
    %408 = vmatprep.subr.mxu0 0.0
    %409 = vmatpush1.msra.mxu0 0.0
    %410 = vmatprep.subr.mxu0 0.0
    %411 = vmatpush1.msra.mxu0 0.0
    %412 = vmatprep.subr.mxu0 0.0
    %413 = vmatpush1.msra.mxu0 0.0
    %414 = vmatprep.subr.mxu0 0.0
    %415 = vmatpush1.msra.mxu0 0.0
    %416 = vmatprep.subr.mxu0 0.0
    %417 = vmatpush1.msra.mxu0 0.0
    %418 = vmatprep.subr.mxu0 0.0
    %419 = vmatpush1.msra.mxu0 0.0
    %420 = vmatprep.subr.mxu0 0.0
    %421 = vmatpush1.msra.mxu0 0.0
    %422 = vmatprep.subr.mxu0 0.0
    %423 = vmatpush1.msra.mxu0 0.0
    %424 = vmatprep.subr.mxu0 0.0
    %425 = vmatpush1.msra.mxu0 0.0
    %426 = vmatprep.subr.mxu0 0.0
    %427 = vmatpush1.msra.mxu0 %v386
    %428 = vmatprep.subr.mxu0 0.0
    %429 = vmatpush1.msra.mxu0 %v385
    %430 = vmatprep.subr.mxu0 0.0
    %431 = vmatpush2.msra.mxu0 0.0
    %432 = vmatprep.subr.mxu0 0.0
    %433 = vmatpush2.msra.mxu0 0.0
    %434 = vmatprep.subr.mxu0 0.0
    %435 = vmatpush2.msra.mxu0 0.0
    %436 = vmatprep.subr.mxu0 0.0
    %437 = vmatpush2.msra.mxu0 0.0
    %438 = vmatprep.subr.mxu0 0.0
    %439 = vmatpush2.msra.mxu0 0.0
    %440 = vmatprep.subr.mxu0 0.0
    %441 = vmatpush2.msra.mxu0 0.0
    %442 = vmatprep.subr.mxu0 0.0
    %443 = vmatpush2.msra.mxu0 0.0
    %444 = vmatprep.subr.mxu0 0.0
    %445 = vmatpush2.msra.mxu0 0.0
    %446 = vmatprep.subr.mxu0 0.0
    %447 = vmatpush2.msra.mxu0 0.0
    %448 = vmatprep.subr.mxu0 0.0
    %449 = vmatpush2.msra.mxu0 0.0
    %450 = vmatprep.subr.mxu0 0.0
    %451 = vmatpush2.msra.mxu0 0.0
    %452 = vmatprep.subr.mxu0 0.0
    %453 = vmatpush2.msra.mxu0 0.0
    %454 = vmatprep.subr.mxu0 0.0
    %455 = vmatpush2.msra.mxu0 0.0
    %456 = vmatprep.subr.mxu0 0.0
    %457 = vmatpush2.msra.mxu0 0.0
    %458 = vmatprep.subr.mxu0 0.0
    %459 = vmatpush2.msra.mxu0 0.0
    %460 = vmatprep.subr.mxu0 0.0
    %461 = vmatpush2.msra.mxu0 0.0
    %462 = vmatprep.mubr.f32.mxu0 0.0
    %463 = vmatmul.mubr.f32.gmra.mxu0 %v396
    %v464 = vpop.f32.mrf.mxu0
    %v465 = vadd.f32 %v392, %v464
    %v466 = vpop.f32.mrf.mxu0
    %467 = vdwg.mxu0
    %v468 = vld [vmem:[#allocation8] sm:$0xff]
    %v469 = vld [vmem:[%s11] sm:$0x1]
    %v471 = vlaneseq
    %v472 = vshrl.u32 %v471, 7
    %v473 = vsub.s32 0, %v472
    %v474 = vrot.slane %v469, %v473
    %vm476 = vcmask 64512
    %v478 = vsel %vm476, %v384, 0
    %480 = vmatprep.subr.mxu0 0.0
    %481 = vmatpush1.msra.mxu0 0.0
    %482 = vmatprep.subr.mxu0 0.0
    %483 = vmatpush1.msra.mxu0 0.0
    %484 = vmatprep.subr.mxu0 0.0
    %485 = vmatpush1.msra.mxu0 0.0
    %486 = vmatprep.subr.mxu0 0.0
    %487 = vmatpush1.msra.mxu0 0.0
    %488 = vmatprep.subr.mxu0 0.0
    %489 = vmatpush1.msra.mxu0 0.0
    %490 = vmatprep.subr.mxu0 0.0
    %491 = vmatpush1.msra.mxu0 0.0
    %492 = vmatprep.subr.mxu0 0.0
    %493 = vmatpush1.msra.mxu0 0.0
    %494 = vmatprep.subr.mxu0 0.0
    %495 = vmatpush1.msra.mxu0 0.0
    %496 = vmatprep.subr.mxu0 0.0
    %497 = vmatpush1.msra.mxu0 0.0
    %498 = vmatprep.subr.mxu0 0.0
    %499 = vmatpush1.msra.mxu0 0.0
    %500 = vmatprep.subr.mxu0 0.0
    %501 = vmatpush1.msra.mxu0 0.0
    %502 = vmatprep.subr.mxu0 0.0
    %503 = vmatpush1.msra.mxu0 0.0
    %504 = vmatprep.subr.mxu0 0.0
    %505 = vmatpush1.msra.mxu0 0.0
    %506 = vmatprep.subr.mxu0 0.0
    %507 = vmatpush1.msra.mxu0 0.0
    %508 = vmatprep.subr.mxu0 0.0
    %509 = vmatpush1.msra.mxu0 0.0
    %510 = vmatprep.subr.mxu0 0.0
    %511 = vmatpush1.msra.mxu0 %v468
    %512 = vmatprep.subr.mxu0 0.0
    %513 = vmatpush2.msra.mxu0 0.0
    %514 = vmatprep.subr.mxu0 0.0
    %515 = vmatpush2.msra.mxu0 0.0
    %516 = vmatprep.subr.mxu0 0.0
    %517 = vmatpush2.msra.mxu0 0.0
    %518 = vmatprep.subr.mxu0 0.0
    %519 = vmatpush2.msra.mxu0 0.0
    %520 = vmatprep.subr.mxu0 0.0
    %521 = vmatpush2.msra.mxu0 0.0
    %522 = vmatprep.subr.mxu0 0.0
    %523 = vmatpush2.msra.mxu0 0.0
    %524 = vmatprep.subr.mxu0 0.0
    %525 = vmatpush2.msra.mxu0 0.0
    %526 = vmatprep.subr.mxu0 0.0
    %527 = vmatpush2.msra.mxu0 0.0
    %528 = vmatprep.subr.mxu0 0.0
    %529 = vmatpush2.msra.mxu0 0.0
    %530 = vmatprep.subr.mxu0 0.0
    %531 = vmatpush2.msra.mxu0 0.0
    %532 = vmatprep.subr.mxu0 0.0
    %533 = vmatpush2.msra.mxu0 0.0
    %534 = vmatprep.subr.mxu0 0.0
    %535 = vmatpush2.msra.mxu0 0.0
    %536 = vmatprep.subr.mxu0 0.0
    %537 = vmatpush2.msra.mxu0 0.0
    %538 = vmatprep.subr.mxu0 0.0
    %539 = vmatpush2.msra.mxu0 0.0
    %540 = vmatprep.subr.mxu0 0.0
    %541 = vmatpush2.msra.mxu0 0.0
    %542 = vmatprep.subr.mxu0 0.0
    %543 = vmatpush2.msra.mxu0 0.0
    %544 = vmatprep.mubr.f32.mxu0 0.0
    %545 = vmatmul.mubr.f32.gmra.mxu0 %v478
    %v546 = vpop.f32.mrf.mxu0
    %v547 = vadd.f32 %v474, %v546
    %v548 = vpop.f32.mrf.mxu0
    %549 = vdwg.mxu0
    %v550 = vld [vmem:[#allocation10] sm:$0x1]
    %v551 = vld [vmem:[#allocation11] sm:$0x1]
    %vm552 = vcmask 261120
    %v553 = vsel %vm552, %v547, 0.0
    %554 = vadd.xlane.f32.xlu0 %v553
    %v555 = vpop.xlane.xlu0 %554
    %v556 = vrcp.pop 32.0
    %v557 = vmul.f32 %v555, %v556
    %v558 = vsub.f32 %v547, %v557
    %v559 = vmul.f32 %v558, %v558
    %v560 = vsel %vm552, %v559, 0.0
    %561 = vadd.xlane.f32.xlu0 %v560
    %v562 = vpop.xlane.xlu0 %561
    %v563 = vmul.f32 %v562, %v556
    %v564 = vadd.f32 %v563, 1e-05
    %v565 = vrsqrt.pop %v564
    %v566 = vmul.f32 %v558, %v565
    %v568 = vlaneseq
    %v569 = vshrl.u32 %v568, 7
    %v570 = vsub.s32 0, %v569
    %v571 = vrot.slane %v550, %v570
    %v573 = vmul.f32 %v566, %v571
    %v575 = vlaneseq
    %v576 = vshrl.u32 %v575, 7
    %v577 = vsub.s32 0, %v576
    %v578 = vrot.slane %v551, %v577
    %v580 = vadd.f32 %v573, %v578
    %v581 = vmul.f32 %v580, 0.5
    %v582 = vmul.f32 %v580, 0.044715
    %v583 = vmul.f32 %v582, %v580
    %v584 = vmul.f32 %v583, %v580
    %v585 = vadd.f32 %v580, %v584
    %v586 = vmul.f32 %v585, 0.7978846
    %v587 = vtanh.pop %v586
    %v588 = vadd.f32 %v587, 1.0
    %v589 = vmul.f32 %v581, %v588
    %v590 = vld [vmem:[#allocation13] sm:$0xff]
    %v591 = vld [vmem:[#allocation13 + $0x8] sm:$0xff]
    %v592 = vld [vmem:[#allocation13 + $0x10] sm:$0xff]
    %v593 = vld [vmem:[#allocation13 + $0x18] sm:$0xff]
    %v594 = vld [vmem:[#allocation14] sm:$0x1]
    %v596 = vlaneseq
    %v597 = vshrl.u32 %v596, 7
    %v598 = vsub.s32 0, %v597
    %v599 = vrot.slane %v594, %v598
    %v602 = vsel %vm552, %v589, 0
    %604 = vmatprep.subr.mxu0 0.0
    %605 = vmatpush1.msra.mxu0 0.0
    %606 = vmatprep.subr.mxu0 0.0
    %607 = vmatpush1.msra.mxu0 0.0
    %608 = vmatprep.subr.mxu0 0.0
    %609 = vmatpush1.msra.mxu0 0.0
    %610 = vmatprep.subr.mxu0 0.0
    %611 = vmatpush1.msra.mxu0 0.0
    %612 = vmatprep.subr.mxu0 0.0
    %613 = vmatpush1.msra.mxu0 0.0
    %614 = vmatprep.subr.mxu0 0.0
    %615 = vmatpush1.msra.mxu0 0.0
    %616 = vmatprep.subr.mxu0 0.0
    %617 = vmatpush1.msra.mxu0 0.0
    %618 = vmatprep.subr.mxu0 0.0
    %619 = vmatpush1.msra.mxu0 0.0
    %620 = vmatprep.subr.mxu0 0.0
    %621 = vmatpush1.msra.mxu0 0.0
    %622 = vmatprep.subr.mxu0 0.0
    %623 = vmatpush1.msra.mxu0 0.0
    %624 = vmatprep.subr.mxu0 0.0
    %625 = vmatpush1.msra.mxu0 0.0
    %626 = vmatprep.subr.mxu0 0.0
    %627 = vmatpush1.msra.mxu0 0.0
    %628 = vmatprep.subr.mxu0 0.0
    %629 = vmatpush1.msra.mxu0 %v593
    %630 = vmatprep.subr.mxu0 0.0
    %631 = vmatpush1.msra.mxu0 %v592
    %632 = vmatprep.subr.mxu0 0.0
    %633 = vmatpush1.msra.mxu0 %v591
    %634 = vmatprep.subr.mxu0 0.0
    %635 = vmatpush1.msra.mxu0 %v590
    %636 = vmatprep.subr.mxu0 0.0
    %637 = vmatpush2.msra.mxu0 0.0
    %638 = vmatprep.subr.mxu0 0.0
    %639 = vmatpush2.msra.mxu0 0.0
    %640 = vmatprep.subr.mxu0 0.0
    %641 = vmatpush2.msra.mxu0 0.0
    %642 = vmatprep.subr.mxu0 0.0
    %643 = vmatpush2.msra.mxu0 0.0
    %644 = vmatprep.subr.mxu0 0.0
    %645 = vmatpush2.msra.mxu0 0.0
    %646 = vmatprep.subr.mxu0 0.0
    %647 = vmatpush2.msra.mxu0 0.0
    %648 = vmatprep.subr.mxu0 0.0
    %649 = vmatpush2.msra.mxu0 0.0
    %650 = vmatprep.subr.mxu0 0.0
    %651 = vmatpush2.msra.mxu0 0.0
    %652 = vmatprep.subr.mxu0 0.0
    %653 = vmatpush2.msra.mxu0 0.0
    %654 = vmatprep.subr.mxu0 0.0
    %655 = vmatpush2.msra.mxu0 0.0
    %656 = vmatprep.subr.mxu0 0.0
    %657 = vmatpush2.msra.mxu0 0.0
    %658 = vmatprep.subr.mxu0 0.0
    %659 = vmatpush2.msra.mxu0 0.0
    %660 = vmatprep.subr.mxu0 0.0
    %661 = vmatpush2.msra.mxu0 0.0
    %662 = vmatprep.subr.mxu0 0.0
    %663 = vmatpush2.msra.mxu0 0.0
    %664 = vmatprep.subr.mxu0 0.0
    %665 = vmatpush2.msra.mxu0 0.0
    %666 = vmatprep.subr.mxu0 0.0
    %667 = vmatpush2.msra.mxu0 0.0
    %668 = vmatprep.mubr.f32.mxu0 0.0
    %669 = vmatmul.mubr.f32.gmra.mxu0 %v602
    %v670 = vpop.f32.mrf.mxu0
    %v671 = vadd.f32 %v599, %v670
    %v672 = vpop.f32.mrf.mxu0
    %673 = vdwg.mxu0
    %v674 = vld [vmem:[#allocation16] sm:$0xff]
    %v675 = vld [vmem:[#allocation16 + $0x8] sm:$0xff]
    %v676 = vld [vmem:[#allocation16 + $0x10] sm:$0xff]
    %v677 = vld [vmem:[#allocation16 + $0x18] sm:$0xff]
    %v678 = vld [vmem:[#allocation17] sm:$0xff]
    %v679 = vld [vmem:[#allocation17 + $0x8] sm:$0xff]
    %v680 = vld [vmem:[#allocation17 + $0x10] sm:$0xff]
    %v681 = vld [vmem:[#allocation17 + $0x18] sm:$0xff]
    %v683 = vsel %vm552, %v465, 0
    %685 = vmatprep.subr.mxu0 0.0
    %686 = vmatpush1.msra.mxu0 0.0
    %687 = vmatprep.subr.mxu0 0.0
    %688 = vmatpush1.msra.mxu0 0.0
    %689 = vmatprep.subr.mxu0 0.0
    %690 = vmatpush1.msra.mxu0 0.0
    %691 = vmatprep.subr.mxu0 0.0
    %692 = vmatpush1.msra.mxu0 0.0
    %693 = vmatprep.subr.mxu0 0.0
    %694 = vmatpush1.msra.mxu0 0.0
    %695 = vmatprep.subr.mxu0 0.0
    %696 = vmatpush1.msra.mxu0 0.0
    %697 = vmatprep.subr.mxu0 0.0
    %698 = vmatpush1.msra.mxu0 0.0
    %699 = vmatprep.subr.mxu0 0.0
    %700 = vmatpush1.msra.mxu0 0.0
    %701 = vmatprep.subr.mxu0 0.0
    %702 = vmatpush1.msra.mxu0 0.0
    %703 = vmatprep.subr.mxu0 0.0
    %704 = vmatpush1.msra.mxu0 0.0
    %705 = vmatprep.subr.mxu0 0.0
    %706 = vmatpush1.msra.mxu0 0.0
    %707 = vmatprep.subr.mxu0 0.0
    %708 = vmatpush1.msra.mxu0 0.0
    %709 = vmatprep.subr.mxu0 0.0
    %710 = vmatpush1.msra.mxu0 %v681
    %711 = vmatprep.subr.mxu0 0.0
    %712 = vmatpush1.msra.mxu0 %v680
    %713 = vmatprep.subr.mxu0 0.0
    %714 = vmatpush1.msra.mxu0 %v679
    %715 = vmatprep.subr.mxu0 0.0
    %716 = vmatpush1.msra.mxu0 %v678
    %717 = vmatprep.subr.mxu0 0.0
    %718 = vmatpush2.msra.mxu0 0.0
    %719 = vmatprep.subr.mxu0 0.0
    %720 = vmatpush2.msra.mxu0 0.0
    %721 = vmatprep.subr.mxu0 0.0
    %722 = vmatpush2.msra.mxu0 0.0
    %723 = vmatprep.subr.mxu0 0.0
    %724 = vmatpush2.msra.mxu0 0.0
    %725 = vmatprep.subr.mxu0 0.0
    %726 = vmatpush2.msra.mxu0 0.0
    %727 = vmatprep.subr.mxu0 0.0
    %728 = vmatpush2.msra.mxu0 0.0
    %729 = vmatprep.subr.mxu0 0.0
    %730 = vmatpush2.msra.mxu0 0.0
    %731 = vmatprep.subr.mxu0 0.0
    %732 = vmatpush2.msra.mxu0 0.0
    %733 = vmatprep.subr.mxu0 0.0
    %734 = vmatpush2.msra.mxu0 0.0
    %735 = vmatprep.subr.mxu0 0.0
    %736 = vmatpush2.msra.mxu0 0.0
    %737 = vmatprep.subr.mxu0 0.0
    %738 = vmatpush2.msra.mxu0 0.0
    %739 = vmatprep.subr.mxu0 0.0
    %740 = vmatpush2.msra.mxu0 0.0
    %741 = vmatprep.subr.mxu0 0.0
    %742 = vmatpush2.msra.mxu0 0.0
    %743 = vmatprep.subr.mxu0 0.0
    %744 = vmatpush2.msra.mxu0 0.0
    %745 = vmatprep.subr.mxu0 0.0
    %746 = vmatpush2.msra.mxu0 0.0
    %747 = vmatprep.subr.mxu0 0.0
    %748 = vmatpush2.msra.mxu0 0.0
    %749 = vmatprep.mubr.f32.mxu0 0.0
    %750 = vmatmul.mubr.f32.gmra.mxu0 %v683
    %v751 = vpop.f32.mrf.mxu0
    %v752 = vadd.f32 0.0, %v751
    %v753 = vpop.f32.mrf.mxu0
    %754 = vdwg.mxu0
    %v756 = vsel %vm552, %v671, 0
    %758 = vmatprep.subr.mxu0 0.0
    %759 = vmatpush1.msra.mxu0 0.0
    %760 = vmatprep.subr.mxu0 0.0
    %761 = vmatpush1.msra.mxu0 0.0
    %762 = vmatprep.subr.mxu0 0.0
    %763 = vmatpush1.msra.mxu0 0.0
    %764 = vmatprep.subr.mxu0 0.0
    %765 = vmatpush1.msra.mxu0 0.0
    %766 = vmatprep.subr.mxu0 0.0
    %767 = vmatpush1.msra.mxu0 0.0
    %768 = vmatprep.subr.mxu0 0.0
    %769 = vmatpush1.msra.mxu0 0.0
    %770 = vmatprep.subr.mxu0 0.0
    %771 = vmatpush1.msra.mxu0 0.0
    %772 = vmatprep.subr.mxu0 0.0
    %773 = vmatpush1.msra.mxu0 0.0
    %774 = vmatprep.subr.mxu0 0.0
    %775 = vmatpush1.msra.mxu0 0.0
    %776 = vmatprep.subr.mxu0 0.0
    %777 = vmatpush1.msra.mxu0 0.0
    %778 = vmatprep.subr.mxu0 0.0
    %779 = vmatpush1.msra.mxu0 0.0
    %780 = vmatprep.subr.mxu0 0.0
    %781 = vmatpush1.msra.mxu0 0.0
    %782 = vmatprep.subr.mxu0 0.0
    %783 = vmatpush1.msra.mxu0 %v677
    %784 = vmatprep.subr.mxu0 0.0
    %785 = vmatpush1.msra.mxu0 %v676
    %786 = vmatprep.subr.mxu0 0.0
    %787 = vmatpush1.msra.mxu0 %v675
    %788 = vmatprep.subr.mxu0 0.0
    %789 = vmatpush1.msra.mxu0 %v674
    %790 = vmatprep.subr.mxu0 0.0
    %791 = vmatpush2.msra.mxu0 0.0
    %792 = vmatprep.subr.mxu0 0.0
    %793 = vmatpush2.msra.mxu0 0.0
    %794 = vmatprep.subr.mxu0 0.0
    %795 = vmatpush2.msra.mxu0 0.0
    %796 = vmatprep.subr.mxu0 0.0
    %797 = vmatpush2.msra.mxu0 0.0
    %798 = vmatprep.subr.mxu0 0.0
    %799 = vmatpush2.msra.mxu0 0.0
    %800 = vmatprep.subr.mxu0 0.0
    %801 = vmatpush2.msra.mxu0 0.0
    %802 = vmatprep.subr.mxu0 0.0
    %803 = vmatpush2.msra.mxu0 0.0
    %804 = vmatprep.subr.mxu0 0.0
    %805 = vmatpush2.msra.mxu0 0.0
    %806 = vmatprep.subr.mxu0 0.0
    %807 = vmatpush2.msra.mxu0 0.0
    %808 = vmatprep.subr.mxu0 0.0
    %809 = vmatpush2.msra.mxu0 0.0
    %810 = vmatprep.subr.mxu0 0.0
    %811 = vmatpush2.msra.mxu0 0.0
    %812 = vmatprep.subr.mxu0 0.0
    %813 = vmatpush2.msra.mxu0 0.0
    %814 = vmatprep.subr.mxu0 0.0
    %815 = vmatpush2.msra.mxu0 0.0
    %816 = vmatprep.subr.mxu0 0.0
    %817 = vmatpush2.msra.mxu0 0.0
    %818 = vmatprep.subr.mxu0 0.0
    %819 = vmatpush2.msra.mxu0 0.0
    %820 = vmatprep.subr.mxu0 0.0
    %821 = vmatpush2.msra.mxu0 0.0
    %822 = vmatprep.mubr.f32.mxu0 0.0
    %823 = vmatmul.mubr.f32.gmra.mxu0 %v756
    %v824 = vpop.f32.mrf.mxu0
    %v825 = vadd.f32 %v752, %v824
    %v826 = vpop.f32.mrf.mxu0
    %827 = vdwg.mxu0
    %v828 = vld [vmem:[#allocation19] sm:$0x1]
    %v830 = vlaneseq
    %v831 = vshrl.u32 %v830, 7
    %v832 = vsub.s32 0, %v831
    %v833 = vrot.slane %v828, %v832
    %v835 = vadd.f32 %v825, %v833
    %v836 = vmul.f32 %v835, 0.5
    %v837 = vmul.f32 %v835, 0.044715
    %v838 = vmul.f32 %v837, %v835
    %v839 = vmul.f32 %v838, %v835
    %v840 = vadd.f32 %v835, %v839
    %v841 = vmul.f32 %v840, 0.7978846
    %v842 = vtanh.pop %v841
    %v843 = vadd.f32 %v842, 1.0
    %v844 = vmul.f32 %v836, %v843
    %v845 = vld [vmem:[#allocation23] sm:$0x1]
    %v846 = vld [vmem:[#allocation25] sm:$0x1]
    %v847 = vsel %vm552, %v844, 0.0
    %848 = vadd.xlane.f32.xlu0 %v847
    %v849 = vpop.xlane.xlu0 %848
    %v850 = vmul.f32 %v849, %v556
    %v851 = vsub.f32 %v844, %v850
    %v852 = vmul.f32 %v851, %v851
    %v853 = vsel %vm552, %v852, 0.0
    %854 = vadd.xlane.f32.xlu0 %v853
    %v855 = vpop.xlane.xlu0 %854
    %v856 = vmul.f32 %v855, %v556
    %v857 = vadd.f32 %v856, 1e-05
    %v858 = vrsqrt.pop %v857
    %v859 = vmul.f32 %v851, %v858
    %v861 = vlaneseq
    %v862 = vshrl.u32 %v861, 7
    %v863 = vsub.s32 0, %v862
    %v864 = vrot.slane %v845, %v863
    %v866 = vmul.f32 %v859, %v864
    %v868 = vlaneseq
    %v869 = vshrl.u32 %v868, 7
    %v870 = vsub.s32 0, %v869
    %v871 = vrot.slane %v846, %v870
    %v873 = vadd.f32 %v866, %v871
    %v874 = vld [vmem:[#allocation20] sm:$0xff]
    %v875 = vld [vmem:[#allocation20 + $0x8] sm:$0xff]
    %v876 = vld [vmem:[#allocation20 + $0x10] sm:$0xff]
    %v877 = vld [vmem:[#allocation20 + $0x18] sm:$0xff]
    %v878 = vld [vmem:[#allocation22] sm:$0x1]
    %v880 = vlaneseq
    %v881 = vshrl.u32 %v880, 7
    %v882 = vsub.s32 0, %v881
    %v883 = vrot.slane %v878, %v882
    %v886 = vsel %vm552, %v873, 0
    %888 = vmatprep.subr.mxu0 0.0
    %889 = vmatpush1.msra.mxu0 0.0
    %890 = vmatprep.subr.mxu0 0.0
    %891 = vmatpush1.msra.mxu0 0.0
    %892 = vmatprep.subr.mxu0 0.0
    %893 = vmatpush1.msra.mxu0 0.0
    %894 = vmatprep.subr.mxu0 0.0
    %895 = vmatpush1.msra.mxu0 0.0
    %896 = vmatprep.subr.mxu0 0.0
    %897 = vmatpush1.msra.mxu0 0.0
    %898 = vmatprep.subr.mxu0 0.0
    %899 = vmatpush1.msra.mxu0 0.0
    %900 = vmatprep.subr.mxu0 0.0
    %901 = vmatpush1.msra.mxu0 0.0
    %902 = vmatprep.subr.mxu0 0.0
    %903 = vmatpush1.msra.mxu0 0.0
    %904 = vmatprep.subr.mxu0 0.0
    %905 = vmatpush1.msra.mxu0 0.0
    %906 = vmatprep.subr.mxu0 0.0
    %907 = vmatpush1.msra.mxu0 0.0
    %908 = vmatprep.subr.mxu0 0.0
    %909 = vmatpush1.msra.mxu0 0.0
    %910 = vmatprep.subr.mxu0 0.0
    %911 = vmatpush1.msra.mxu0 0.0
    %912 = vmatprep.subr.mxu0 0.0
    %913 = vmatpush1.msra.mxu0 %v877
    %914 = vmatprep.subr.mxu0 0.0
    %915 = vmatpush1.msra.mxu0 %v876
    %916 = vmatprep.subr.mxu0 0.0
    %917 = vmatpush1.msra.mxu0 %v875
    %918 = vmatprep.subr.mxu0 0.0
    %919 = vmatpush1.msra.mxu0 %v874
    %920 = vmatprep.subr.mxu0 0.0
    %921 = vmatpush2.msra.mxu0 0.0
    %922 = vmatprep.subr.mxu0 0.0
    %923 = vmatpush2.msra.mxu0 0.0
    %924 = vmatprep.subr.mxu0 0.0
    %925 = vmatpush2.msra.mxu0 0.0
    %926 = vmatprep.subr.mxu0 0.0
    %927 = vmatpush2.msra.mxu0 0.0
    %928 = vmatprep.subr.mxu0 0.0
    %929 = vmatpush2.msra.mxu0 0.0
    %930 = vmatprep.subr.mxu0 0.0
    %931 = vmatpush2.msra.mxu0 0.0
    %932 = vmatprep.subr.mxu0 0.0
    %933 = vmatpush2.msra.mxu0 0.0
    %934 = vmatprep.subr.mxu0 0.0
    %935 = vmatpush2.msra.mxu0 0.0
    %936 = vmatprep.subr.mxu0 0.0
    %937 = vmatpush2.msra.mxu0 0.0
    %938 = vmatprep.subr.mxu0 0.0
    %939 = vmatpush2.msra.mxu0 0.0
    %940 = vmatprep.subr.mxu0 0.0
    %941 = vmatpush2.msra.mxu0 0.0
    %942 = vmatprep.subr.mxu0 0.0
    %943 = vmatpush2.msra.mxu0 0.0
    %944 = vmatprep.subr.mxu0 0.0
    %945 = vmatpush2.msra.mxu0 0.0
    %946 = vmatprep.subr.mxu0 0.0
    %947 = vmatpush2.msra.mxu0 0.0
    %948 = vmatprep.subr.mxu0 0.0
    %949 = vmatpush2.msra.mxu0 0.0
    %950 = vmatprep.subr.mxu0 0.0
    %951 = vmatpush2.msra.mxu0 0.0
    %952 = vmatprep.mubr.f32.mxu0 0.0
    %953 = vmatmul.mubr.f32.gmra.mxu0 %v886
    %v954 = vpop.f32.mrf.mxu0
    %v955 = vadd.f32 %v883, %v954
    %v956 = vpop.f32.mrf.mxu0
    %957 = vdwg.mxu0
    %v958 = vadd.f32 %v844, %v955
    %v959 = vld [vmem:[#allocation26] sm:$0x1]
    %v960 = vld [vmem:[#allocation28] sm:$0x1]
    %v961 = vsel %vm552, %v958, 0.0
    %962 = vadd.xlane.f32.xlu0 %v961
    %v963 = vpop.xlane.xlu0 %962
    %v964 = vmul.f32 %v963, %v556
    %v965 = vsub.f32 %v958, %v964
    %v966 = vmul.f32 %v965, %v965
    %v967 = vsel %vm552, %v966, 0.0
    %968 = vadd.xlane.f32.xlu0 %v967
    %v969 = vpop.xlane.xlu0 %968
    %v970 = vmul.f32 %v969, %v556
    %v971 = vadd.f32 %v970, 1e-05
    %v972 = vrsqrt.pop %v971
    %v973 = vmul.f32 %v965, %v972
    %v975 = vlaneseq
    %v976 = vshrl.u32 %v975, 7
    %v977 = vsub.s32 0, %v976
    %v978 = vrot.slane %v959, %v977
    %v980 = vmul.f32 %v973, %v978
    %v982 = vlaneseq
    %v983 = vshrl.u32 %v982, 7
    %v984 = vsub.s32 0, %v983
    %v985 = vrot.slane %v960, %v984
    %v987 = vadd.f32 %v980, %v985
    %v988 = vld [vmem:[%s39] sm:$0xff]
    %v989 = vld [vmem:[%s39 + $0x8] sm:$0xff]
    %v990 = vld [vmem:[%s39 + $0x10] sm:$0xff]
    %v991 = vld [vmem:[%s39 + $0x18] sm:$0xff]
    %v992 = vld [vmem:[%s41] sm:$0x1]
    %v994 = vlaneseq
    %v995 = vshrl.u32 %v994, 7
    %v996 = vsub.s32 0, %v995
    %v997 = vrot.slane %v992, %v996
    %v1000 = vsel %vm552, %v987, 0
    %1002 = vmatprep.subr.mxu0 0.0
    %1003 = vmatpush1.msra.mxu0 0.0
    %1004 = vmatprep.subr.mxu0 0.0
    %1005 = vmatpush1.msra.mxu0 0.0
    %1006 = vmatprep.subr.mxu0 0.0
    %1007 = vmatpush1.msra.mxu0 0.0
    %1008 = vmatprep.subr.mxu0 0.0
    %1009 = vmatpush1.msra.mxu0 0.0
    %1010 = vmatprep.subr.mxu0 0.0
    %1011 = vmatpush1.msra.mxu0 0.0
    %1012 = vmatprep.subr.mxu0 0.0
    %1013 = vmatpush1.msra.mxu0 0.0
    %1014 = vmatprep.subr.mxu0 0.0
    %1015 = vmatpush1.msra.mxu0 0.0
    %1016 = vmatprep.subr.mxu0 0.0
    %1017 = vmatpush1.msra.mxu0 0.0
    %1018 = vmatprep.subr.mxu0 0.0
    %1019 = vmatpush1.msra.mxu0 0.0
    %1020 = vmatprep.subr.mxu0 0.0
    %1021 = vmatpush1.msra.mxu0 0.0
    %1022 = vmatprep.subr.mxu0 0.0
    %1023 = vmatpush1.msra.mxu0 0.0
    %1024 = vmatprep.subr.mxu0 0.0
    %1025 = vmatpush1.msra.mxu0 0.0
    %1026 = vmatprep.subr.mxu0 0.0
    %1027 = vmatpush1.msra.mxu0 %v991
    %1028 = vmatprep.subr.mxu0 0.0
    %1029 = vmatpush1.msra.mxu0 %v990
    %1030 = vmatprep.subr.mxu0 0.0
    %1031 = vmatpush1.msra.mxu0 %v989
    %1032 = vmatprep.subr.mxu0 0.0
    %1033 = vmatpush1.msra.mxu0 %v988
    %1034 = vmatprep.subr.mxu0 0.0
    %1035 = vmatpush2.msra.mxu0 0.0
    %1036 = vmatprep.subr.mxu0 0.0
    %1037 = vmatpush2.msra.mxu0 0.0
    %1038 = vmatprep.subr.mxu0 0.0
    %1039 = vmatpush2.msra.mxu0 0.0
    %1040 = vmatprep.subr.mxu0 0.0
    %1041 = vmatpush2.msra.mxu0 0.0
    %1042 = vmatprep.subr.mxu0 0.0
    %1043 = vmatpush2.msra.mxu0 0.0
    %1044 = vmatprep.subr.mxu0 0.0
    %1045 = vmatpush2.msra.mxu0 0.0
    %1046 = vmatprep.subr.mxu0 0.0
    %1047 = vmatpush2.msra.mxu0 0.0
    %1048 = vmatprep.subr.mxu0 0.0
    %1049 = vmatpush2.msra.mxu0 0.0
    %1050 = vmatprep.subr.mxu0 0.0
    %1051 = vmatpush2.msra.mxu0 0.0
    %1052 = vmatprep.subr.mxu0 0.0
    %1053 = vmatpush2.msra.mxu0 0.0
    %1054 = vmatprep.subr.mxu0 0.0
    %1055 = vmatpush2.msra.mxu0 0.0
    %1056 = vmatprep.subr.mxu0 0.0
    %1057 = vmatpush2.msra.mxu0 0.0
    %1058 = vmatprep.subr.mxu0 0.0
    %1059 = vmatpush2.msra.mxu0 0.0
    %1060 = vmatprep.subr.mxu0 0.0
    %1061 = vmatpush2.msra.mxu0 0.0
    %1062 = vmatprep.subr.mxu0 0.0
    %1063 = vmatpush2.msra.mxu0 0.0
    %1064 = vmatprep.subr.mxu0 0.0
    %1065 = vmatpush2.msra.mxu0 0.0
    %1066 = vmatprep.mubr.f32.mxu0 0.0
    %1067 = vmatmul.mubr.f32.gmra.mxu0 %v1000
    %v1068 = vpop.f32.mrf.mxu0
    %v1069 = vadd.f32 %v997, %v1068
    %v1070 = vpop.f32.mrf.mxu0
    %1071 = vdwg.mxu0
    %v1072 = vmax.f32 %v1069, 0.0
    %v1073 = vld [vmem:[#allocation29] sm:$0xff]
    %v1074 = vld [vmem:[#allocation29 + $0x8] sm:$0xff]
    %v1075 = vld [vmem:[#allocation29 + $0x10] sm:$0xff]
    %v1076 = vld [vmem:[#allocation29 + $0x18] sm:$0xff]
    %v1077 = vld [vmem:[%s45] sm:$0x1]
    %v1079 = vlaneseq
    %v1080 = vshrl.u32 %v1079, 7
    %v1081 = vsub.s32 0, %v1080
    %v1082 = vrot.slane %v1077, %v1081
    %v1085 = vsel %vm552, %v1072, 0
    %1087 = vmatprep.subr.mxu0 0.0
    %1088 = vmatpush1.msra.mxu0 0.0
    %1089 = vmatprep.subr.mxu0 0.0
    %1090 = vmatpush1.msra.mxu0 0.0
    %1091 = vmatprep.subr.mxu0 0.0
    %1092 = vmatpush1.msra.mxu0 0.0
    %1093 = vmatprep.subr.mxu0 0.0
    %1094 = vmatpush1.msra.mxu0 0.0
    %1095 = vmatprep.subr.mxu0 0.0
    %1096 = vmatpush1.msra.mxu0 0.0
    %1097 = vmatprep.subr.mxu0 0.0
    %1098 = vmatpush1.msra.mxu0 0.0
    %1099 = vmatprep.subr.mxu0 0.0
    %1100 = vmatpush1.msra.mxu0 0.0
    %1101 = vmatprep.subr.mxu0 0.0
    %1102 = vmatpush1.msra.mxu0 0.0
    %1103 = vmatprep.subr.mxu0 0.0
    %1104 = vmatpush1.msra.mxu0 0.0
    %1105 = vmatprep.subr.mxu0 0.0
    %1106 = vmatpush1.msra.mxu0 0.0
    %1107 = vmatprep.subr.mxu0 0.0
    %1108 = vmatpush1.msra.mxu0 0.0
    %1109 = vmatprep.subr.mxu0 0.0
    %1110 = vmatpush1.msra.mxu0 0.0
    %1111 = vmatprep.subr.mxu0 0.0
    %1112 = vmatpush1.msra.mxu0 %v1076
    %1113 = vmatprep.subr.mxu0 0.0
    %1114 = vmatpush1.msra.mxu0 %v1075
    %1115 = vmatprep.subr.mxu0 0.0
    %1116 = vmatpush1.msra.mxu0 %v1074
    %1117 = vmatprep.subr.mxu0 0.0
    %1118 = vmatpush1.msra.mxu0 %v1073
    %1119 = vmatprep.subr.mxu0 0.0
    %1120 = vmatpush2.msra.mxu0 0.0
    %1121 = vmatprep.subr.mxu0 0.0
    %1122 = vmatpush2.msra.mxu0 0.0
    %1123 = vmatprep.subr.mxu0 0.0
    %1124 = vmatpush2.msra.mxu0 0.0
    %1125 = vmatprep.subr.mxu0 0.0
    %1126 = vmatpush2.msra.mxu0 0.0
    %1127 = vmatprep.subr.mxu0 0.0
    %1128 = vmatpush2.msra.mxu0 0.0
    %1129 = vmatprep.subr.mxu0 0.0
    %1130 = vmatpush2.msra.mxu0 0.0
    %1131 = vmatprep.subr.mxu0 0.0
    %1132 = vmatpush2.msra.mxu0 0.0
    %1133 = vmatprep.subr.mxu0 0.0
    %1134 = vmatpush2.msra.mxu0 0.0
    %1135 = vmatprep.subr.mxu0 0.0
    %1136 = vmatpush2.msra.mxu0 0.0
    %1137 = vmatprep.subr.mxu0 0.0
    %1138 = vmatpush2.msra.mxu0 0.0
    %1139 = vmatprep.subr.mxu0 0.0
    %1140 = vmatpush2.msra.mxu0 0.0
    %1141 = vmatprep.subr.mxu0 0.0
    %1142 = vmatpush2.msra.mxu0 0.0
    %1143 = vmatprep.subr.mxu0 0.0
    %1144 = vmatpush2.msra.mxu0 0.0
    %1145 = vmatprep.subr.mxu0 0.0
    %1146 = vmatpush2.msra.mxu0 0.0
    %1147 = vmatprep.subr.mxu0 0.0
    %1148 = vmatpush2.msra.mxu0 0.0
    %1149 = vmatprep.subr.mxu0 0.0
    %1150 = vmatpush2.msra.mxu0 0.0
    %1151 = vmatprep.mubr.f32.mxu0 0.0
    %1152 = vmatmul.mubr.f32.gmra.mxu0 %v1085
    %v1153 = vpop.f32.mrf.mxu0
    %v1154 = vadd.f32 %v1082, %v1153
    %v1155 = vpop.f32.mrf.mxu0
    %1156 = vdwg.mxu0
    %v1157 = vadd.f32 %v958, %v1154
    %v1158 = vld [vmem:[#allocation31] sm:$0xff]
    %v1159 = vld [vmem:[#allocation31 + $0x8] sm:$0xff]
    %v1160 = vld [vmem:[#allocation31 + $0x10] sm:$0xff]
    %v1161 = vld [vmem:[#allocation31 + $0x18] sm:$0xff]
    %v1162 = vld [vmem:[%s49] sm:$0x1]
    %v1164 = vlaneseq
    %v1165 = vshrl.u32 %v1164, 7
    %v1166 = vsub.s32 0, %v1165
    %v1167 = vrot.slane %v1162, %v1166
    %v1170 = vsel %vm552, %v1157, 0
    %1172 = vmatprep.subr.mxu0 0.0
    %1173 = vmatpush1.msra.mxu0 0.0
    %1174 = vmatprep.subr.mxu0 0.0
    %1175 = vmatpush1.msra.mxu0 0.0
    %1176 = vmatprep.subr.mxu0 0.0
    %1177 = vmatpush1.msra.mxu0 0.0
    %1178 = vmatprep.subr.mxu0 0.0
    %1179 = vmatpush1.msra.mxu0 0.0
    %1180 = vmatprep.subr.mxu0 0.0
    %1181 = vmatpush1.msra.mxu0 0.0
    %1182 = vmatprep.subr.mxu0 0.0
    %1183 = vmatpush1.msra.mxu0 0.0
    %1184 = vmatprep.subr.mxu0 0.0
    %1185 = vmatpush1.msra.mxu0 0.0
    %1186 = vmatprep.subr.mxu0 0.0
    %1187 = vmatpush1.msra.mxu0 0.0
    %1188 = vmatprep.subr.mxu0 0.0
    %1189 = vmatpush1.msra.mxu0 0.0
    %1190 = vmatprep.subr.mxu0 0.0
    %1191 = vmatpush1.msra.mxu0 0.0
    %1192 = vmatprep.subr.mxu0 0.0
    %1193 = vmatpush1.msra.mxu0 0.0
    %1194 = vmatprep.subr.mxu0 0.0
    %1195 = vmatpush1.msra.mxu0 0.0
    %1196 = vmatprep.subr.mxu0 0.0
    %1197 = vmatpush1.msra.mxu0 %v1161
    %1198 = vmatprep.subr.mxu0 0.0
    %1199 = vmatpush1.msra.mxu0 %v1160
    %1200 = vmatprep.subr.mxu0 0.0
    %1201 = vmatpush1.msra.mxu0 %v1159
    %1202 = vmatprep.subr.mxu0 0.0
    %1203 = vmatpush1.msra.mxu0 %v1158
    %1204 = vmatprep.subr.mxu0 0.0
    %1205 = vmatpush2.msra.mxu0 0.0
    %1206 = vmatprep.subr.mxu0 0.0
    %1207 = vmatpush2.msra.mxu0 0.0
    %1208 = vmatprep.subr.mxu0 0.0
    %1209 = vmatpush2.msra.mxu0 0.0
    %1210 = vmatprep.subr.mxu0 0.0
    %1211 = vmatpush2.msra.mxu0 0.0
    %1212 = vmatprep.subr.mxu0 0.0
    %1213 = vmatpush2.msra.mxu0 0.0
    %1214 = vmatprep.subr.mxu0 0.0
    %1215 = vmatpush2.msra.mxu0 0.0
    %1216 = vmatprep.subr.mxu0 0.0
    %1217 = vmatpush2.msra.mxu0 0.0
    %1218 = vmatprep.subr.mxu0 0.0
    %1219 = vmatpush2.msra.mxu0 0.0
    %1220 = vmatprep.subr.mxu0 0.0
    %1221 = vmatpush2.msra.mxu0 0.0
    %1222 = vmatprep.subr.mxu0 0.0
    %1223 = vmatpush2.msra.mxu0 0.0
    %1224 = vmatprep.subr.mxu0 0.0
    %1225 = vmatpush2.msra.mxu0 0.0
    %1226 = vmatprep.subr.mxu0 0.0
    %1227 = vmatpush2.msra.mxu0 0.0
    %1228 = vmatprep.subr.mxu0 0.0
    %1229 = vmatpush2.msra.mxu0 0.0
    %1230 = vmatprep.subr.mxu0 0.0
    %1231 = vmatpush2.msra.mxu0 0.0
    %1232 = vmatprep.subr.mxu0 0.0
    %1233 = vmatpush2.msra.mxu0 0.0
    %1234 = vmatprep.subr.mxu0 0.0
    %1235 = vmatpush2.msra.mxu0 0.0
    %1236 = vmatprep.mubr.f32.mxu0 0.0
    %1237 = vmatmul.mubr.f32.gmra.mxu0 %v1170
    %v1238 = vpop.f32.mrf.mxu0
    %v1239 = vadd.f32 %v1167, %v1238
    %v1240 = vpop.f32.mrf.mxu0
    %1241 = vdwg.mxu0
    %v1242 = vmax.f32 %v1239, 0.0
    %v1243 = vld [vmem:[#allocation32] sm:$0xff]
    %v1244 = vld [vmem:[#allocation32 + $0x8] sm:$0xff]
    %v1245 = vld [vmem:[#allocation32 + $0x10] sm:$0xff]
    %v1246 = vld [vmem:[#allocation32 + $0x18] sm:$0xff]
    %v1247 = vld [vmem:[%s53] sm:$0x1]
    %v1249 = vlaneseq
    %v1250 = vshrl.u32 %v1249, 7
    %v1251 = vsub.s32 0, %v1250
    %v1252 = vrot.slane %v1247, %v1251
    %v1255 = vsel %vm552, %v1242, 0
    %1257 = vmatprep.subr.mxu0 0.0
    %1258 = vmatpush1.msra.mxu0 0.0
    %1259 = vmatprep.subr.mxu0 0.0
    %1260 = vmatpush1.msra.mxu0 0.0
    %1261 = vmatprep.subr.mxu0 0.0
    %1262 = vmatpush1.msra.mxu0 0.0
    %1263 = vmatprep.subr.mxu0 0.0
    %1264 = vmatpush1.msra.mxu0 0.0
    %1265 = vmatprep.subr.mxu0 0.0
    %1266 = vmatpush1.msra.mxu0 0.0
    %1267 = vmatprep.subr.mxu0 0.0
    %1268 = vmatpush1.msra.mxu0 0.0
    %1269 = vmatprep.subr.mxu0 0.0
    %1270 = vmatpush1.msra.mxu0 0.0
    %1271 = vmatprep.subr.mxu0 0.0
    %1272 = vmatpush1.msra.mxu0 0.0
    %1273 = vmatprep.subr.mxu0 0.0
    %1274 = vmatpush1.msra.mxu0 0.0
    %1275 = vmatprep.subr.mxu0 0.0
    %1276 = vmatpush1.msra.mxu0 0.0
    %1277 = vmatprep.subr.mxu0 0.0
    %1278 = vmatpush1.msra.mxu0 0.0
    %1279 = vmatprep.subr.mxu0 0.0
    %1280 = vmatpush1.msra.mxu0 0.0
    %1281 = vmatprep.subr.mxu0 0.0
    %1282 = vmatpush1.msra.mxu0 %v1246
    %1283 = vmatprep.subr.mxu0 0.0
    %1284 = vmatpush1.msra.mxu0 %v1245
    %1285 = vmatprep.subr.mxu0 0.0
    %1286 = vmatpush1.msra.mxu0 %v1244
    %1287 = vmatprep.subr.mxu0 0.0
    %1288 = vmatpush1.msra.mxu0 %v1243
    %1289 = vmatprep.subr.mxu0 0.0
    %1290 = vmatpush2.msra.mxu0 0.0
    %1291 = vmatprep.subr.mxu0 0.0
    %1292 = vmatpush2.msra.mxu0 0.0
    %1293 = vmatprep.subr.mxu0 0.0
    %1294 = vmatpush2.msra.mxu0 0.0
    %1295 = vmatprep.subr.mxu0 0.0
    %1296 = vmatpush2.msra.mxu0 0.0
    %1297 = vmatprep.subr.mxu0 0.0
    %1298 = vmatpush2.msra.mxu0 0.0
    %1299 = vmatprep.subr.mxu0 0.0
    %1300 = vmatpush2.msra.mxu0 0.0
    %1301 = vmatprep.subr.mxu0 0.0
    %1302 = vmatpush2.msra.mxu0 0.0
    %1303 = vmatprep.subr.mxu0 0.0
    %1304 = vmatpush2.msra.mxu0 0.0
    %1305 = vmatprep.subr.mxu0 0.0
    %1306 = vmatpush2.msra.mxu0 0.0
    %1307 = vmatprep.subr.mxu0 0.0
    %1308 = vmatpush2.msra.mxu0 0.0
    %1309 = vmatprep.subr.mxu0 0.0
    %1310 = vmatpush2.msra.mxu0 0.0
    %1311 = vmatprep.subr.mxu0 0.0
    %1312 = vmatpush2.msra.mxu0 0.0
    %1313 = vmatprep.subr.mxu0 0.0
    %1314 = vmatpush2.msra.mxu0 0.0
    %1315 = vmatprep.subr.mxu0 0.0
    %1316 = vmatpush2.msra.mxu0 0.0
    %1317 = vmatprep.subr.mxu0 0.0
    %1318 = vmatpush2.msra.mxu0 0.0
    %1319 = vmatprep.subr.mxu0 0.0
    %1320 = vmatpush2.msra.mxu0 0.0
    %1321 = vmatprep.mubr.f32.mxu0 0.0
    %1322 = vmatmul.mubr.f32.gmra.mxu0 %v1255
    %v1323 = vpop.f32.mrf.mxu0
    %v1324 = vadd.f32 %v1252, %v1323
    %v1325 = vpop.f32.mrf.mxu0
    %1326 = vdwg.mxu0
    %v1327 = vmax.f32 %v1324, 0.0
    %v1328 = vld [vmem:[#allocation34] sm:$0xff]
    %v1329 = vld [vmem:[#allocation34 + $0x8] sm:$0xff]
    %v1330 = vld [vmem:[#allocation34 + $0x10] sm:$0xff]
    %v1331 = vld [vmem:[#allocation34 + $0x18] sm:$0xff]
    %v1332 = vld [vmem:[%s57] sm:$0x1]
    %v1334 = vlaneseq
    %v1335 = vshrl.u32 %v1334, 7
    %v1336 = vsub.s32 0, %v1335
    %v1337 = vrot.slane %v1332, %v1336
    %v1340 = vsel %vm552, %v1327, 0
    %1342 = vmatprep.subr.mxu0 0.0
    %1343 = vmatpush1.msra.mxu0 0.0
    %1344 = vmatprep.subr.mxu0 0.0
    %1345 = vmatpush1.msra.mxu0 0.0
    %1346 = vmatprep.subr.mxu0 0.0
    %1347 = vmatpush1.msra.mxu0 0.0
    %1348 = vmatprep.subr.mxu0 0.0
    %1349 = vmatpush1.msra.mxu0 0.0
    %1350 = vmatprep.subr.mxu0 0.0
    %1351 = vmatpush1.msra.mxu0 0.0
    %1352 = vmatprep.subr.mxu0 0.0
    %1353 = vmatpush1.msra.mxu0 0.0
    %1354 = vmatprep.subr.mxu0 0.0
    %1355 = vmatpush1.msra.mxu0 0.0
    %1356 = vmatprep.subr.mxu0 0.0
    %1357 = vmatpush1.msra.mxu0 0.0
    %1358 = vmatprep.subr.mxu0 0.0
    %1359 = vmatpush1.msra.mxu0 0.0
    %1360 = vmatprep.subr.mxu0 0.0
    %1361 = vmatpush1.msra.mxu0 0.0
    %1362 = vmatprep.subr.mxu0 0.0
    %1363 = vmatpush1.msra.mxu0 0.0
    %1364 = vmatprep.subr.mxu0 0.0
    %1365 = vmatpush1.msra.mxu0 0.0
    %1366 = vmatprep.subr.mxu0 0.0
    %1367 = vmatpush1.msra.mxu0 %v1331
    %1368 = vmatprep.subr.mxu0 0.0
    %1369 = vmatpush1.msra.mxu0 %v1330
    %1370 = vmatprep.subr.mxu0 0.0
    %1371 = vmatpush1.msra.mxu0 %v1329
    %1372 = vmatprep.subr.mxu0 0.0
    %1373 = vmatpush1.msra.mxu0 %v1328
    %1374 = vmatprep.subr.mxu0 0.0
    %1375 = vmatpush2.msra.mxu0 0.0
    %1376 = vmatprep.subr.mxu0 0.0
    %1377 = vmatpush2.msra.mxu0 0.0
    %1378 = vmatprep.subr.mxu0 0.0
    %1379 = vmatpush2.msra.mxu0 0.0
    %1380 = vmatprep.subr.mxu0 0.0
    %1381 = vmatpush2.msra.mxu0 0.0
    %1382 = vmatprep.subr.mxu0 0.0
    %1383 = vmatpush2.msra.mxu0 0.0
    %1384 = vmatprep.subr.mxu0 0.0
    %1385 = vmatpush2.msra.mxu0 0.0
    %1386 = vmatprep.subr.mxu0 0.0
    %1387 = vmatpush2.msra.mxu0 0.0
    %1388 = vmatprep.subr.mxu0 0.0
    %1389 = vmatpush2.msra.mxu0 0.0
    %1390 = vmatprep.subr.mxu0 0.0
    %1391 = vmatpush2.msra.mxu0 0.0
    %1392 = vmatprep.subr.mxu0 0.0
    %1393 = vmatpush2.msra.mxu0 0.0
    %1394 = vmatprep.subr.mxu0 0.0
    %1395 = vmatpush2.msra.mxu0 0.0
    %1396 = vmatprep.subr.mxu0 0.0
    %1397 = vmatpush2.msra.mxu0 0.0
    %1398 = vmatprep.subr.mxu0 0.0
    %1399 = vmatpush2.msra.mxu0 0.0
    %1400 = vmatprep.subr.mxu0 0.0
    %1401 = vmatpush2.msra.mxu0 0.0
    %1402 = vmatprep.subr.mxu0 0.0
    %1403 = vmatpush2.msra.mxu0 0.0
    %1404 = vmatprep.subr.mxu0 0.0
    %1405 = vmatpush2.msra.mxu0 0.0
    %1406 = vmatprep.mubr.f32.mxu0 0.0
    %1407 = vmatmul.mubr.f32.gmra.mxu0 %v1340
    %v1408 = vpop.f32.mrf.mxu0
    %v1409 = vadd.f32 %v1337, %v1408
    %v1410 = vpop.f32.mrf.mxu0
    %1411 = vdwg.mxu0
    %1412 = vst [vmem:[#allocation35] sm:$0xff] %v1409
    // Predicated region
    $region202: #{tpu_custom_call.1} parent=1 // pred_check
      _
    $region203: #{tpu_custom_call.1} parent=1 // pred_check_branch
      %1414 = sbr.rel (0) target = $region205
    $region204: #{tpu_custom_call.1} parent=1 // pred_region
      %s1416 = ssub.s32 128, 128
      %1417 = vsyncadd [#allocation4], %s1416
      %s1419 = sshll.u32 [#allocation35], 4
      %s1420 = int_to_ptr.vmem [resolvable:$true] %s1419
      %1422 = dma.vmem_to_hbm [thread:$0]  %s1420, 128, %s59, [#allocation4]
    $region205: #{tpu_custom_call.1} parent=1 // pred_fallthru
      _
    // Predicated region
    $region206: #{tpu_custom_call.1} parent=1 // pred_check
      _
    $region207: #{tpu_custom_call.1} parent=1 // pred_check_branch
      %1424 = sbr.rel (0) target = $region209
    $region208: #{tpu_custom_call.1} parent=1 // pred_region
      %1425 = dma.done [#allocation4], 128
    $region209: #{tpu_custom_call.1} parent=1 // pred_fallthru
      _
    %1426 = vsyncpa [#allocation3], 1
    %1427 = vsyncpa [#allocation6], 1
    %1428 = vsyncpa [#allocation9], 1
    %1429 = vsyncpa [#allocation12], 1
    %1430 = vsyncpa [#allocation15], 1
    %1431 = vsyncpa [#allocation18], 1
    %1432 = vsyncpa [#allocation21], 1
    %1433 = vsyncpa [#allocation24], 1
    %1434 = vsyncpa [#allocation27], 1
    %1435 = vsyncpa [#allocation30], 1
    %1436 = vsyncpa [#allocation33], 1
    %1437 = vsyncpa [#allocation4], 1

</llo_original>
